<compile_context>
chip_gen: v5e
topology: v5e:2x2
jax: 0.10.0
libtpu: 0.0.40
codegen_flags: <defaults>
</compile_context>

<pallas_src>
import functools

import jax
import jax.numpy as jnp
import numpy as np
from jax.experimental import pallas as pl
from jax.experimental.pallas import tpu as pltpu

LANE = 128          # TPU lane width: every layer's feature dim is zero-padded to 128.
BIAS_ROWS = 8       # bias slab padded to (8, 128) for clean sublane tiling.
MAX_BLOCK_B = 1024  # batch-tile cap (keeps double-buffered x/out tiny vs. VMEM limits).


def linnet_kernel(x_ref, w_ref, b_ref, out_ref, *, act_dtype):
    """One batch tile of the full 6-layer MLP.

    x_ref  : (TB, 128)       bf16  input rows, zero-padded to 128 lanes
    w_ref  : (6, 128, 128)   bf16  all layer weights, (in, out) layout, zero-padded;
                                   layer 1 already carries the encode fold
    b_ref  : (8, 128)        f32   all layer biases in rows 0..5, zero-padded
    out_ref: (TB, 128)       f32   lane-dense output; real values in cols [:D_out]
    act_dtype: bf16 on v6e/v7x (bf16 VPU/EUP), f32 on v5e.
    """
    n_layers = w_ref.shape[0]
    h = x_ref[...]                                            # bf16, feeds MXU directly
    for i in range(n_layers - 1):                             # layers 1..5: Linear + sigmoid
        z = jnp.dot(h, w_ref[i], preferred_element_type=jnp.float32)   # bf16 MXU, f32 acc
        z = z.astype(act_dtype) + b_ref[i:i + 1, :].astype(act_dtype)  # (1,128) sublane bcast
        # sigmoid(z) == 0.5*tanh(0.5*z) + 0.5 : keeps the transcendental on the EUP slot
        h = (0.5 * jnp.tanh(0.5 * z) + 0.5).astype(jnp.bfloat16)       # no-op cast if bf16
    z = jnp.dot(h, w_ref[n_layers - 1], preferred_element_type=jnp.float32)  # final: no act
    out_ref[...] = (z + b_ref[n_layers - 1:n_layers, :]).astype(out_ref.dtype)


def _round_up(x, m):
    return ((x + m - 1) // m) * m


def _device_kind():
    try:
        return jax.devices()[0].device_kind.lower()
    except Exception:
        return ""


def _pick_block_b(batch, kind):
    # v7x has 2 TensorCores/chip: keep >= 2 grid steps so the "parallel" batch axis
    # can be sharded across both.  v5e/v6e have one TC: collapse small batches to a
    # single grid step (every removed step saves ~600 cycles of fixed overhead).
    n_cores = 2 if "v7" in kind else 1
    per_core = pl.cdiv(batch, n_cores)
    return max(8, min(MAX_BLOCK_B, _round_up(per_core, 8)))


def _pick_act_dtype(kind):
    # v6e/v7x VPU/EUP support bf16 (halves elementwise + transcendental work);
    # v5e (and older) are f32-only on those units -> keep f32 activations there.
    return jnp.bfloat16 if ("v6" in kind or "v7" in kind) else jnp.float32


def linnet_forward(x, xmin, xmax, params, *, block_b=None, act_dtype=None):
    """x: (B, D_in) f32; xmin/xmax: (D_in,) f32;
    params: list of 6 (W_t, b) with W_t shaped (in_features, out_features)."""
    n_layers = len(params)
    B, D_in = x.shape
    D_out = params[-1][0].shape[1]

    # ---- fold encode into layer 1 (exact algebraic fold, done in f32) ----
    # xi = (x - xmin)/(xmax - xmin) - 0.5
    # xi @ W1 + b1 == x @ (W1 * scale[:,None]) + (b1 - (xmin*scale + 0.5) @ W1)
    # NOTE: like the reference module, no guard against xmax == xmin (inf/nan).
    scale = 1.0 / (xmax - xmin)
    shift = xmin * scale + 0.5
    w1, b1 = params[0]
    layers = [(w1 * scale[:, None], b1 - shift @ w1)] + list(params[1:])

    # ---- pack all weights / biases into two zero-padded slabs (2 DMAs, not 12) ----
    w_slab = jnp.zeros((n_layers, LANE, LANE), jnp.float32)
    b_slab = jnp.zeros((BIAS_ROWS, LANE), jnp.float32)
    for i, (w, b) in enumerate(layers):
        w_slab = w_slab.at[i, :w.shape[0], :w.shape[1]].set(w)
        b_slab = b_slab.at[i, :b.shape[0]].set(b)
    w_slab = w_slab.astype(jnp.bfloat16)   # bf16 MXU operands, f32 accumulation

    # ---- device-dependent defaults: tile size & activation dtype ----
    kind = _device_kind()
    if act_dtype is None:
        act_dtype = _pick_act_dtype(kind)
    if block_b is None:
        block_b = _pick_block_b(B, kind)
    tb = block_b
    assert tb % 8 == 0, "batch tile must be a multiple of 8 sublanes"
    n_tiles = pl.cdiv(B, tb)
    b_pad = n_tiles * tb

    # ---- pad batch to the tile and lanes to 128, stored bf16 (halves the x DMA) ----
    x_pad = jnp.pad(x.astype(jnp.bfloat16), ((0, b_pad - B), (0, LANE - D_in)))

    grid_spec = pltpu.PrefetchScalarGridSpec(
        num_scalar_prefetch=0,
        grid=(n_tiles,),
        in_specs=[
            pl.BlockSpec((tb, LANE), lambda i: (i, 0)),                 # x streams
            pl.BlockSpec((n_layers, LANE, LANE), lambda i: (0, 0, 0)),  # weights VMEM-resident
            pl.BlockSpec((BIAS_ROWS, LANE), lambda i: (0, 0)),          # biases VMEM-resident
        ],
        out_specs=pl.BlockSpec((tb, LANE), lambda i: (i, 0)),
    )

    out_pad = pl.pallas_call(
        functools.partial(linnet_kernel, act_dtype=act_dtype),
        out_shape=jax.ShapeDtypeStruct((b_pad, LANE), jnp.float32),
        grid_spec=grid_spec,
        compiler_params=pltpu.CompilerParams(
            dimension_semantics=("parallel",)),
    )(x_pad, w_slab, b_slab)

    return out_pad[:B, :D_out]


def init_linear(key, fan_in, fan_out):
    """Mimics PyTorch nn.Linear default init (uniform +/- 1/sqrt(fan_in)).
    Returns weight already transposed to (in, out)."""
    kw, kb = jax.random.split(key)
    bound = 1.0 / np.sqrt(fan_in)
    w_t = jax.random.uniform(kw, (fan_in, fan_out), jnp.float32, -bound, bound)
    b = jax.random.uniform(kb, (fan_out,), jnp.float32, -bound, bound)
    return w_t, b


def linnet_reference(x, xmin, xmax, params):
    """Pure-JAX f32 reference matching the PyTorch forward exactly."""
    xi = (x - xmin[None, :]) / (xmax[None, :] - xmin[None, :]) - 0.5
    h = xi
    for i, (w_t, b) in enumerate(params):
        z = h @ w_t + b[None, :]
        h = jax.nn.sigmoid(z) if i < len(params) - 1 else z
    return h


if __name__ == "__main__":
    # LinNet dims: D_in -> H1 -> H1 -> H2 -> H2 -> H3 -> D_out
    B, D_in, H1, H2, H3, D_out = 256, 4, 32, 32, 16, 8

    key = jax.random.PRNGKey(0)
    keys = jax.random.split(key, 8)

    x = jax.random.normal(keys[0], (B, D_in), jnp.float32) * 2.0 + 1.0
    xmin = jnp.full((D_in,), -5.0, jnp.float32)
    xmax = jnp.full((D_in,), 5.0, jnp.float32)

    dims = [(D_in, H1), (H1, H1), (H1, H2), (H2, H2), (H2, H3), (H3, D_out)]
    params = [init_linear(keys[i + 1], fi, fo) for i, (fi, fo) in enumerate(dims)]

    y = linnet_forward(x, xmin, xmax, params)   # auto tile / activation dtype
    y = jax.block_until_ready(y)

    y_ref = linnet_reference(x, xmin, xmax, params)
    # bf16 MXU operands (+ bf16 activations on v6e/v7x) vs pure-f32 reference.
    np.testing.assert_allclose(np.asarray(y), np.asarray(y_ref), rtol=5e-2, atol=5e-2)

    print("KERNEL_OK")
</pallas_src>

<mosaic_0001>
module attributes {stable_mosaic.version = 11 : i64} {
  func.func @linnet_kernel(%arg0: i32, %arg1: memref<256x128xbf16, #tpu.memory_space<vmem>>, %arg2: memref<6x128x128xbf16, #tpu.memory_space<vmem>>, %arg3: memref<8x128xf32, #tpu.memory_space<vmem>>, %arg4: memref<256x128xf32, #tpu.memory_space<vmem>>) attributes {dimension_semantics = [#tpu.dimension_semantics<parallel>], iteration_bounds = array<i64: 1>, scalar_prefetch = 0 : i64, scratch_operands = 0 : i64, tpu.core_type = #tpu.core_type<tc>, window_params = [{transform_indices = @transform_0, window_bounds = array<i64: 256, 128>}, {pipeline_mode = #tpu.pipeline_mode<synchronous>, transform_indices = @transform_1, window_bounds = array<i64: 6, 128, 128>}, {pipeline_mode = #tpu.pipeline_mode<synchronous>, transform_indices = @transform_2, window_bounds = array<i64: 8, 128>}, {transform_indices = @transform_3, window_bounds = array<i64: 256, 128>}]} {
    %c0 = arith.constant 0 : index
    %c0_0 = arith.constant 0 : index
    %0 = vector.load %arg1[%c0, %c0_0] : memref<256x128xbf16, #tpu.memory_space<vmem>>, vector<256x128xbf16>
    %c0_1 = arith.constant 0 : index
    %c0_2 = arith.constant 0 : index
    %c0_3 = arith.constant 0 : index
    %1 = vector.load %arg2[%c0_1, %c0_2, %c0_3] : memref<6x128x128xbf16, #tpu.memory_space<vmem>>, vector<1x128x128xbf16>
    %2 = vector.shape_cast %1 : vector<1x128x128xbf16> to vector<128x128xbf16>
    %cst = arith.constant dense<0.000000e+00> : vector<256x128xf32>
    %3 = tpu.matmul %0, %2, %cst {dimension_numbers = #tpu.dot_dimension_numbers<[1], [0], [0], [1], [0, 0, 1, 1], [], []>} : vector<256x128xbf16>, vector<128x128xbf16>, vector<256x128xf32> -> vector<256x128xf32>
    %c0_4 = arith.constant 0 : index
    %c0_5 = arith.constant 0 : index
    %4 = vector.load %arg3[%c0_4, %c0_5] : memref<8x128xf32, #tpu.memory_space<vmem>>, vector<1x128xf32>
    %5 = vector.broadcast %4 : vector<1x128xf32> to vector<256x128xf32>
    %6 = arith.addf %3, %5 : vector<256x128xf32>
    %cst_6 = arith.constant 5.000000e-01 : f32
    %7 = vector.broadcast %cst_6 : f32 to vector<256x128xf32>
    %8 = arith.mulf %7, %6 : vector<256x128xf32>
    %9 = math.tanh %8 : vector<256x128xf32>
    %cst_7 = arith.constant 5.000000e-01 : f32
    %10 = vector.broadcast %cst_7 : f32 to vector<256x128xf32>
    %11 = arith.mulf %10, %9 : vector<256x128xf32>
    %cst_8 = arith.constant 5.000000e-01 : f32
    %12 = vector.broadcast %cst_8 : f32 to vector<256x128xf32>
    %13 = arith.addf %11, %12 : vector<256x128xf32>
    %14 = arith.truncf %13 : vector<256x128xf32> to vector<256x128xbf16>
    %c1 = arith.constant 1 : index
    %c0_9 = arith.constant 0 : index
    %c0_10 = arith.constant 0 : index
    %15 = vector.load %arg2[%c1, %c0_9, %c0_10] : memref<6x128x128xbf16, #tpu.memory_space<vmem>>, vector<1x128x128xbf16>
    %16 = vector.shape_cast %15 : vector<1x128x128xbf16> to vector<128x128xbf16>
    %cst_11 = arith.constant dense<0.000000e+00> : vector<256x128xf32>
    %17 = tpu.matmul %14, %16, %cst_11 {dimension_numbers = #tpu.dot_dimension_numbers<[1], [0], [0], [1], [0, 0, 1, 1], [], []>} : vector<256x128xbf16>, vector<128x128xbf16>, vector<256x128xf32> -> vector<256x128xf32>
    %c1_12 = arith.constant 1 : index
    %c0_13 = arith.constant 0 : index
    %18 = vector.load %arg3[%c1_12, %c0_13] : memref<8x128xf32, #tpu.memory_space<vmem>>, vector<1x128xf32>
    %19 = vector.broadcast %18 : vector<1x128xf32> to vector<256x128xf32>
    %20 = arith.addf %17, %19 : vector<256x128xf32>
    %cst_14 = arith.constant 5.000000e-01 : f32
    %21 = vector.broadcast %cst_14 : f32 to vector<256x128xf32>
    %22 = arith.mulf %21, %20 : vector<256x128xf32>
    %23 = math.tanh %22 : vector<256x128xf32>
    %cst_15 = arith.constant 5.000000e-01 : f32
    %24 = vector.broadcast %cst_15 : f32 to vector<256x128xf32>
    %25 = arith.mulf %24, %23 : vector<256x128xf32>
    %cst_16 = arith.constant 5.000000e-01 : f32
    %26 = vector.broadcast %cst_16 : f32 to vector<256x128xf32>
    %27 = arith.addf %25, %26 : vector<256x128xf32>
    %28 = arith.truncf %27 : vector<256x128xf32> to vector<256x128xbf16>
    %c2 = arith.constant 2 : index
    %c0_17 = arith.constant 0 : index
    %c0_18 = arith.constant 0 : index
    %29 = vector.load %arg2[%c2, %c0_17, %c0_18] : memref<6x128x128xbf16, #tpu.memory_space<vmem>>, vector<1x128x128xbf16>
    %30 = vector.shape_cast %29 : vector<1x128x128xbf16> to vector<128x128xbf16>
    %cst_19 = arith.constant dense<0.000000e+00> : vector<256x128xf32>
    %31 = tpu.matmul %28, %30, %cst_19 {dimension_numbers = #tpu.dot_dimension_numbers<[1], [0], [0], [1], [0, 0, 1, 1], [], []>} : vector<256x128xbf16>, vector<128x128xbf16>, vector<256x128xf32> -> vector<256x128xf32>
    %c2_20 = arith.constant 2 : index
    %c0_21 = arith.constant 0 : index
    %32 = vector.load %arg3[%c2_20, %c0_21] : memref<8x128xf32, #tpu.memory_space<vmem>>, vector<1x128xf32>
    %33 = vector.broadcast %32 : vector<1x128xf32> to vector<256x128xf32>
    %34 = arith.addf %31, %33 : vector<256x128xf32>
    %cst_22 = arith.constant 5.000000e-01 : f32
    %35 = vector.broadcast %cst_22 : f32 to vector<256x128xf32>
    %36 = arith.mulf %35, %34 : vector<256x128xf32>
    %37 = math.tanh %36 : vector<256x128xf32>
    %cst_23 = arith.constant 5.000000e-01 : f32
    %38 = vector.broadcast %cst_23 : f32 to vector<256x128xf32>
    %39 = arith.mulf %38, %37 : vector<256x128xf32>
    %cst_24 = arith.constant 5.000000e-01 : f32
    %40 = vector.broadcast %cst_24 : f32 to vector<256x128xf32>
    %41 = arith.addf %39, %40 : vector<256x128xf32>
    %42 = arith.truncf %41 : vector<256x128xf32> to vector<256x128xbf16>
    %c3 = arith.constant 3 : index
    %c0_25 = arith.constant 0 : index
    %c0_26 = arith.constant 0 : index
    %43 = vector.load %arg2[%c3, %c0_25, %c0_26] : memref<6x128x128xbf16, #tpu.memory_space<vmem>>, vector<1x128x128xbf16>
    %44 = vector.shape_cast %43 : vector<1x128x128xbf16> to vector<128x128xbf16>
    %cst_27 = arith.constant dense<0.000000e+00> : vector<256x128xf32>
    %45 = tpu.matmul %42, %44, %cst_27 {dimension_numbers = #tpu.dot_dimension_numbers<[1], [0], [0], [1], [0, 0, 1, 1], [], []>} : vector<256x128xbf16>, vector<128x128xbf16>, vector<256x128xf32> -> vector<256x128xf32>
    %c3_28 = arith.constant 3 : index
    %c0_29 = arith.constant 0 : index
    %46 = vector.load %arg3[%c3_28, %c0_29] : memref<8x128xf32, #tpu.memory_space<vmem>>, vector<1x128xf32>
    %47 = vector.broadcast %46 : vector<1x128xf32> to vector<256x128xf32>
    %48 = arith.addf %45, %47 : vector<256x128xf32>
    %cst_30 = arith.constant 5.000000e-01 : f32
    %49 = vector.broadcast %cst_30 : f32 to vector<256x128xf32>
    %50 = arith.mulf %49, %48 : vector<256x128xf32>
    %51 = math.tanh %50 : vector<256x128xf32>
    %cst_31 = arith.constant 5.000000e-01 : f32
    %52 = vector.broadcast %cst_31 : f32 to vector<256x128xf32>
    %53 = arith.mulf %52, %51 : vector<256x128xf32>
    %cst_32 = arith.constant 5.000000e-01 : f32
    %54 = vector.broadcast %cst_32 : f32 to vector<256x128xf32>
    %55 = arith.addf %53, %54 : vector<256x128xf32>
    %56 = arith.truncf %55 : vector<256x128xf32> to vector<256x128xbf16>
    %c4 = arith.constant 4 : index
    %c0_33 = arith.constant 0 : index
    %c0_34 = arith.constant 0 : index
    %57 = vector.load %arg2[%c4, %c0_33, %c0_34] : memref<6x128x128xbf16, #tpu.memory_space<vmem>>, vector<1x128x128xbf16>
    %58 = vector.shape_cast %57 : vector<1x128x128xbf16> to vector<128x128xbf16>
    %cst_35 = arith.constant dense<0.000000e+00> : vector<256x128xf32>
    %59 = tpu.matmul %56, %58, %cst_35 {dimension_numbers = #tpu.dot_dimension_numbers<[1], [0], [0], [1], [0, 0, 1, 1], [], []>} : vector<256x128xbf16>, vector<128x128xbf16>, vector<256x128xf32> -> vector<256x128xf32>
    %c4_36 = arith.constant 4 : index
    %c0_37 = arith.constant 0 : index
    %60 = vector.load %arg3[%c4_36, %c0_37] : memref<8x128xf32, #tpu.memory_space<vmem>>, vector<1x128xf32>
    %61 = vector.broadcast %60 : vector<1x128xf32> to vector<256x128xf32>
    %62 = arith.addf %59, %61 : vector<256x128xf32>
    %cst_38 = arith.constant 5.000000e-01 : f32
    %63 = vector.broadcast %cst_38 : f32 to vector<256x128xf32>
    %64 = arith.mulf %63, %62 : vector<256x128xf32>
    %65 = math.tanh %64 : vector<256x128xf32>
    %cst_39 = arith.constant 5.000000e-01 : f32
    %66 = vector.broadcast %cst_39 : f32 to vector<256x128xf32>
    %67 = arith.mulf %66, %65 : vector<256x128xf32>
    %cst_40 = arith.constant 5.000000e-01 : f32
    %68 = vector.broadcast %cst_40 : f32 to vector<256x128xf32>
    %69 = arith.addf %67, %68 : vector<256x128xf32>
    %70 = arith.truncf %69 : vector<256x128xf32> to vector<256x128xbf16>
    %c5 = arith.constant 5 : index
    %c0_41 = arith.constant 0 : index
    %c0_42 = arith.constant 0 : index
    %71 = vector.load %arg2[%c5, %c0_41, %c0_42] : memref<6x128x128xbf16, #tpu.memory_space<vmem>>, vector<1x128x128xbf16>
    %72 = vector.shape_cast %71 : vector<1x128x128xbf16> to vector<128x128xbf16>
    %cst_43 = arith.constant dense<0.000000e+00> : vector<256x128xf32>
    %73 = tpu.matmul %70, %72, %cst_43 {dimension_numbers = #tpu.dot_dimension_numbers<[1], [0], [0], [1], [0, 0, 1, 1], [], []>} : vector<256x128xbf16>, vector<128x128xbf16>, vector<256x128xf32> -> vector<256x128xf32>
    %c5_44 = arith.constant 5 : index
    %c0_45 = arith.constant 0 : index
    %74 = vector.load %arg3[%c5_44, %c0_45] : memref<8x128xf32, #tpu.memory_space<vmem>>, vector<1x128xf32>
    %75 = vector.broadcast %74 : vector<1x128xf32> to vector<256x128xf32>
    %76 = arith.addf %73, %75 : vector<256x128xf32>
    %c0_46 = arith.constant 0 : index
    %c0_47 = arith.constant 0 : index
    %77 = vector.load %arg4[%c0_46, %c0_47] : memref<256x128xf32, #tpu.memory_space<vmem>>, vector<256x128xf32>
    tpu.vector_store %arg4[%c0_46, %c0_47], %76 {strides = array<i32>} : memref<256x128xf32, #tpu.memory_space<vmem>>, vector<256x128xf32>,
    return
  }
  func.func @transform_0(%arg0: i32) -> (i32, i32) {
    %c0_i32 = arith.constant 0 : i32
    %c0_i32_0 = arith.constant 0 : i32
    return %arg0, %c0_i32 : i32, i32
  }
  func.func @transform_1(%arg0: i32) -> (i32, i32, i32) {
    %c0_i32 = arith.constant 0 : i32
    %c0_i32_0 = arith.constant 0 : i32
    %c0_i32_1 = arith.constant 0 : i32
    %c0_i32_2 = arith.constant 0 : i32
    return %c0_i32, %c0_i32_0, %c0_i32_1 : i32, i32, i32
  }
  func.func @transform_2(%arg0: i32) -> (i32, i32) {
    %c0_i32 = arith.constant 0 : i32
    %c0_i32_0 = arith.constant 0 : i32
    %c0_i32_1 = arith.constant 0 : i32
    return %c0_i32, %c0_i32_0 : i32, i32
  }
  func.func @transform_3(%arg0: i32) -> (i32, i32) {
    %c0_i32 = arith.constant 0 : i32
    %c0_i32_0 = arith.constant 0 : i32
    return %arg0, %c0_i32 : i32, i32
  }
}

</mosaic_0001>

<llo_original>
// kernel: tpu_custom_call.1
$region0: #{tpu_custom_call.1}
  #allocation0 [shape = 'u32[]', space=smem, size = 0x4, offset = 0x4, fixed_abs, tag = 'smem constant byte address 0x4 - core index']
  #allocation1 [shape = 'u32[72,128]{1,0:T(1,128)}', space=vmem, size = 0x9000, scoped, tag = 'internal scratch']
  %s0 = inlined_call_operand.hbm [shape: bf16[256,128], index: 0, kind: input, shape index: {}]
  %s1 = inlined_call_operand.hbm [shape: bf16[6,128,128], index: 1, kind: input, shape index: {}]
  %s2 = inlined_call_operand.hbm [shape: f32[8,128], index: 2, kind: input, shape index: {}]
  %s3 = inlined_call_operand.hbm [shape: f32[256,128], index: 3, kind: output, shape index: {}]
  %s4 = sld [smem:[#allocation0]]
  $region34: #{tpu_custom_call.1} parent=0
    _
  %s6 = ssub.s32 1, %s4
  %s7 = scalar_select 0, %s6, %s4
  $region1: #{tpu_custom_call.1} parent=0
    #allocation2 [shape = 'u8[65536]{0}', space=vmem, size = 0x10000, scoped, tag = 'input window, operand 0, single buffered']
    #allocation3 [shape = 's32[1]{0}', space=sflag, size = 0x4, scoped, tag = 'scoped memory for tpu_custom_call.1']
    #allocation4 [shape = 's32[1]{0}', space=sflag, size = 0x4, scoped, tag = 'scoped memory for tpu_custom_call.1']
    #allocation5 [shape = 'u8[196608]{0}', space=vmem, size = 0x30000, scoped, tag = 'input window, operand 1, single buffered']
    #allocation6 [shape = 's32[1]{0}', space=sflag, size = 0x4, scoped, tag = 'scoped memory for tpu_custom_call.1']
    #allocation7 [shape = 'u8[4096]{0}', space=vmem, size = 0x1000, scoped, tag = 'input window, operand 2, single buffered']
    #allocation8 [shape = 'u8[131072]{0}', space=vmem, size = 0x20000, scoped, tag = 'output window, operand 0, single buffered']
    %8 = vsyncpa [#allocation3], 0
    %9 = vsyncpa [#allocation6], 0
    %10 = vsyncpa [#allocation4], 0
    // Predicated region
    $region2: #{tpu_custom_call.1} parent=1 // pred_check
      _
    $region3: #{tpu_custom_call.1} parent=1 // pred_check_branch
      %12 = sbr.rel (0) target = $region5
    $region4: #{tpu_custom_call.1} parent=1 // pred_region
      %14 = vsyncadd [#allocation3], 0
      %s15 = sshll.u32 %s0, 4
      %s16 = int_to_ptr.hbm [resolvable:$true] %s15
      %s17 = sshll.u32 [#allocation2], 4
      %s18 = int_to_ptr.vmem [resolvable:$true] %s17
      %23 = dma.hbm_to_vmem [thread:$0]  %s16, 2048, %s18, [#allocation3], 64, 64, 4
    $region5: #{tpu_custom_call.1} parent=1 // pred_fallthru
      _
    // Predicated region
    $region6: #{tpu_custom_call.1} parent=1 // pred_check
      _
    $region7: #{tpu_custom_call.1} parent=1 // pred_check_branch
      %25 = sbr.rel (0) target = $region9
    $region8: #{tpu_custom_call.1} parent=1 // pred_region
      %27 = vsyncadd [#allocation6], 0
      %s28 = sshll.u32 %s1, 4
      %s29 = int_to_ptr.hbm [resolvable:$true] %s28
      %s30 = sshll.u32 [#allocation5], 4
      %s31 = int_to_ptr.vmem [resolvable:$true] %s30
      %36 = dma.hbm_to_vmem [thread:$0]  %s29, 6144, %s31, [#allocation6], 64, 64, 4
    $region9: #{tpu_custom_call.1} parent=1 // pred_fallthru
      _
    // Predicated region
    $region10: #{tpu_custom_call.1} parent=1 // pred_check
      _
    $region11: #{tpu_custom_call.1} parent=1 // pred_check_branch
      %38 = sbr.rel (0) target = $region13
    $region12: #{tpu_custom_call.1} parent=1 // pred_region
      %40 = vsyncadd [#allocation6], 0
      %s42 = sshll.u32 %s2, 4
      %s43 = int_to_ptr.hbm [resolvable:$true] %s42
      %s44 = sshll.u32 [#allocation7], 4
      %s45 = int_to_ptr.vmem [resolvable:$true] %s44
      %47 = dma.hbm_to_vmem [thread:$0]  %s43, 128, %s45, [#allocation6]
    $region13: #{tpu_custom_call.1} parent=1 // pred_fallthru
      _
    // Predicated region
    $region14: #{tpu_custom_call.1} parent=1 // pred_check
      _
    $region15: #{tpu_custom_call.1} parent=1 // pred_check_branch
      %49 = sbr.rel (0) target = $region17
    $region16: #{tpu_custom_call.1} parent=1 // pred_region
      %51 = dma.done [#allocation3], 2048
    $region17: #{tpu_custom_call.1} parent=1 // pred_fallthru
      _
    // Predicated region
    $region18: #{tpu_custom_call.1} parent=1 // pred_check
      _
    $region19: #{tpu_custom_call.1} parent=1 // pred_check_branch
      %53 = sbr.rel (0) target = $region21
    $region20: #{tpu_custom_call.1} parent=1 // pred_region
      %55 = dma.done [#allocation6], 6144
    $region21: #{tpu_custom_call.1} parent=1 // pred_fallthru
      _
    // Predicated region
    $region22: #{tpu_custom_call.1} parent=1 // pred_check
      _
    $region23: #{tpu_custom_call.1} parent=1 // pred_check_branch
      %57 = sbr.rel (0) target = $region25
    $region24: #{tpu_custom_call.1} parent=1 // pred_region
      %59 = dma.done [#allocation6], 128
    $region25: #{tpu_custom_call.1} parent=1 // pred_fallthru
      _
    %v60 = vld [vmem:[#allocation2] sm:$0xf]
    %v61 = vld [vmem:[#allocation2 + $0x4] sm:$0xf]
    %v62 = vld [vmem:[#allocation2 + $0x8] sm:$0xf]
    %v63 = vld [vmem:[#allocation2 + $0xc] sm:$0xf]
    %v64 = vld [vmem:[#allocation2 + $0x10] sm:$0xf]
    %v65 = vld [vmem:[#allocation2 + $0x14] sm:$0xf]
    %v66 = vld [vmem:[#allocation2 + $0x18] sm:$0xf]
    %v67 = vld [vmem:[#allocation2 + $0x1c] sm:$0xf]
    %v68 = vld [vmem:[#allocation2 + $0x20] sm:$0xf]
    %v69 = vld [vmem:[#allocation2 + $0x24] sm:$0xf]
    %v70 = vld [vmem:[#allocation2 + $0x28] sm:$0xf]
    %v71 = vld [vmem:[#allocation2 + $0x2c] sm:$0xf]
    %v72 = vld [vmem:[#allocation2 + $0x30] sm:$0xf]
    %v73 = vld [vmem:[#allocation2 + $0x34] sm:$0xf]
    %v74 = vld [vmem:[#allocation2 + $0x38] sm:$0xf]
    %v75 = vld [vmem:[#allocation2 + $0x3c] sm:$0xf]
    %v76 = vld [vmem:[#allocation2 + $0x40] sm:$0xf]
    %v77 = vld [vmem:[#allocation2 + $0x44] sm:$0xf]
    %v78 = vld [vmem:[#allocation2 + $0x48] sm:$0xf]
    %v79 = vld [vmem:[#allocation2 + $0x4c] sm:$0xf]
    %v80 = vld [vmem:[#allocation2 + $0x50] sm:$0xf]
    %v81 = vld [vmem:[#allocation2 + $0x54] sm:$0xf]
    %v82 = vld [vmem:[#allocation2 + $0x58] sm:$0xf]
    %v83 = vld [vmem:[#allocation2 + $0x5c] sm:$0xf]
    %v84 = vld [vmem:[#allocation2 + $0x60] sm:$0xf]
    %v85 = vld [vmem:[#allocation2 + $0x64] sm:$0xf]
    %v86 = vld [vmem:[#allocation2 + $0x68] sm:$0xf]
    %v87 = vld [vmem:[#allocation2 + $0x6c] sm:$0xf]
    %v88 = vld [vmem:[#allocation2 + $0x70] sm:$0xf]
    %v89 = vld [vmem:[#allocation2 + $0x74] sm:$0xf]
    %v90 = vld [vmem:[#allocation2 + $0x78] sm:$0xf]
    %v91 = vld [vmem:[#allocation2 + $0x7c] sm:$0xf]
    %v92 = vld [vmem:[#allocation5] sm:$0xf]
    %v93 = vld [vmem:[#allocation5 + $0x4] sm:$0xf]
    %v94 = vld [vmem:[#allocation5 + $0x8] sm:$0xf]
    %v95 = vld [vmem:[#allocation5 + $0xc] sm:$0xf]
    %v96 = vld [vmem:[#allocation5 + $0x10] sm:$0xf]
    %v97 = vld [vmem:[#allocation5 + $0x14] sm:$0xf]
    %v98 = vld [vmem:[#allocation5 + $0x18] sm:$0xf]
    %v99 = vld [vmem:[#allocation5 + $0x1c] sm:$0xf]
    %v100 = vld [vmem:[#allocation5 + $0x20] sm:$0xf]
    %v101 = vld [vmem:[#allocation5 + $0x24] sm:$0xf]
    %v102 = vld [vmem:[#allocation5 + $0x28] sm:$0xf]
    %v103 = vld [vmem:[#allocation5 + $0x2c] sm:$0xf]
    %v104 = vld [vmem:[#allocation5 + $0x30] sm:$0xf]
    %v105 = vld [vmem:[#allocation5 + $0x34] sm:$0xf]
    %v106 = vld [vmem:[#allocation5 + $0x38] sm:$0xf]
    %v107 = vld [vmem:[#allocation5 + $0x3c] sm:$0xf]
    %v108 = vld [vmem:[#allocation7] sm:$0x1]
    %v109 = vperm.slane %v108, 0
    %v142 = vunpack.c.l.b16 %v60
    %v143 = vunpack.c.l.b16 %v61
    %v144 = vunpack.c.l.b16 %v62
    %v145 = vunpack.c.l.b16 %v63
    %v146 = vunpack.c.l.b16 %v64
    %v147 = vunpack.c.l.b16 %v65
    %v148 = vunpack.c.l.b16 %v66
    %v149 = vunpack.c.l.b16 %v67
    %v150 = vunpack.c.l.b16 %v68
    %v151 = vunpack.c.l.b16 %v69
    %v152 = vunpack.c.l.b16 %v70
    %v153 = vunpack.c.l.b16 %v71
    %v154 = vunpack.c.l.b16 %v72
    %v155 = vunpack.c.l.b16 %v73
    %v156 = vunpack.c.l.b16 %v74
    %v157 = vunpack.c.l.b16 %v75
    %v158 = vunpack.c.l.b16 %v76
    %v159 = vunpack.c.l.b16 %v77
    %v160 = vunpack.c.l.b16 %v78
    %v161 = vunpack.c.l.b16 %v79
    %v162 = vunpack.c.l.b16 %v80
    %v163 = vunpack.c.l.b16 %v81
    %v164 = vunpack.c.l.b16 %v82
    %v165 = vunpack.c.l.b16 %v83
    %v166 = vunpack.c.l.b16 %v84
    %v167 = vunpack.c.l.b16 %v85
    %v168 = vunpack.c.l.b16 %v86
    %v169 = vunpack.c.l.b16 %v87
    %v170 = vunpack.c.l.b16 %v88
    %v171 = vunpack.c.l.b16 %v89
    %v172 = vunpack.c.l.b16 %v90
    %v173 = vunpack.c.l.b16 %v91
    %v174 = vpack.c.b16 %v143, %v142
    %v175 = vpack.c.b16 %v145, %v144
    %v176 = vpack.c.b16 %v147, %v146
    %v177 = vpack.c.b16 %v149, %v148
    %v178 = vpack.c.b16 %v151, %v150
    %v179 = vpack.c.b16 %v153, %v152
    %v180 = vpack.c.b16 %v155, %v154
    %v181 = vpack.c.b16 %v157, %v156
    %v182 = vpack.c.b16 %v159, %v158
    %v183 = vpack.c.b16 %v161, %v160
    %v184 = vpack.c.b16 %v163, %v162
    %v185 = vpack.c.b16 %v165, %v164
    %v186 = vpack.c.b16 %v167, %v166
    %v187 = vpack.c.b16 %v169, %v168
    %v188 = vpack.c.b16 %v171, %v170
    %v189 = vpack.c.b16 %v173, %v172
    %v222 = vunpack.c.l.b16 %v92
    %v223 = vunpack.c.l.b16 %v93
    %v224 = vunpack.c.l.b16 %v94
    %v225 = vunpack.c.l.b16 %v95
    %v226 = vunpack.c.l.b16 %v96
    %v227 = vunpack.c.l.b16 %v97
    %v228 = vunpack.c.l.b16 %v98
    %v229 = vunpack.c.l.b16 %v99
    %v230 = vunpack.c.l.b16 %v100
    %v231 = vunpack.c.l.b16 %v101
    %v232 = vunpack.c.l.b16 %v102
    %v233 = vunpack.c.l.b16 %v103
    %v234 = vunpack.c.l.b16 %v104
    %v235 = vunpack.c.l.b16 %v105
    %v236 = vunpack.c.l.b16 %v106
    %v237 = vunpack.c.l.b16 %v107
    %v238 = vpack.c.b16 %v223, %v222
    %v239 = vpack.c.b16 %v225, %v224
    %v240 = vpack.c.b16 %v227, %v226
    %v241 = vpack.c.b16 %v229, %v228
    %v242 = vpack.c.b16 %v231, %v230
    %v243 = vpack.c.b16 %v233, %v232
    %v244 = vpack.c.b16 %v235, %v234
    %v245 = vpack.c.b16 %v237, %v236
    %254 = vmatpush.bf16.msra.mxu0 %v245
    %255 = vmatpush.bf16.msra.mxu0 %v244
    %256 = vmatpush.bf16.msra.mxu0 %v243
    %257 = vmatpush.bf16.msra.mxu0 %v242
    %258 = vmatpush.bf16.msra.mxu0 %v241
    %259 = vmatpush.bf16.msra.mxu0 %v240
    %260 = vmatpush.bf16.msra.mxu0 %v239
    %261 = vmatpush.bf16.msra.mxu0 %v238
    %262 = vmatmul.bf16.gmra.mxu0 %v174
    %v263 = vpop.f32.mrf.mxu0
    %v264 = vadd.f32 %v109, %v263
    %v265 = vpop.f32.mrf.mxu0
    %v266 = vadd.f32 %v109, %v265
    %267 = vmatmul.bf16.gmra.mxu0 %v175
    %v268 = vpop.f32.mrf.mxu0
    %v269 = vadd.f32 %v109, %v268
    %v270 = vpop.f32.mrf.mxu0
    %v271 = vadd.f32 %v109, %v270
    %272 = vmatmul.bf16.gmra.mxu0 %v176
    %v273 = vpop.f32.mrf.mxu0
    %v274 = vadd.f32 %v109, %v273
    %v275 = vpop.f32.mrf.mxu0
    %v276 = vadd.f32 %v109, %v275
    %277 = vmatmul.bf16.gmra.mxu0 %v177
    %v278 = vpop.f32.mrf.mxu0
    %v279 = vadd.f32 %v109, %v278
    %v280 = vpop.f32.mrf.mxu0
    %v281 = vadd.f32 %v109, %v280
    %282 = vmatmul.bf16.gmra.mxu0 %v178
    %v283 = vpop.f32.mrf.mxu0
    %v284 = vadd.f32 %v109, %v283
    %v285 = vpop.f32.mrf.mxu0
    %v286 = vadd.f32 %v109, %v285
    %287 = vmatmul.bf16.gmra.mxu0 %v179
    %v288 = vpop.f32.mrf.mxu0
    %v289 = vadd.f32 %v109, %v288
    %v290 = vpop.f32.mrf.mxu0
    %v291 = vadd.f32 %v109, %v290
    %292 = vmatmul.bf16.gmra.mxu0 %v180
    %v293 = vpop.f32.mrf.mxu0
    %v294 = vadd.f32 %v109, %v293
    %v295 = vpop.f32.mrf.mxu0
    %v296 = vadd.f32 %v109, %v295
    %297 = vmatmul.bf16.gmra.mxu0 %v181
    %v298 = vpop.f32.mrf.mxu0
    %v299 = vadd.f32 %v109, %v298
    %v300 = vpop.f32.mrf.mxu0
    %v301 = vadd.f32 %v109, %v300
    %302 = vmatmul.bf16.gmra.mxu0 %v182
    %v303 = vpop.f32.mrf.mxu0
    %v304 = vadd.f32 %v109, %v303
    %v305 = vpop.f32.mrf.mxu0
    %v306 = vadd.f32 %v109, %v305
    %307 = vmatmul.bf16.gmra.mxu0 %v183
    %v308 = vpop.f32.mrf.mxu0
    %v309 = vadd.f32 %v109, %v308
    %v310 = vpop.f32.mrf.mxu0
    %v311 = vadd.f32 %v109, %v310
    %312 = vmatmul.bf16.gmra.mxu0 %v184
    %v313 = vpop.f32.mrf.mxu0
    %v314 = vadd.f32 %v109, %v313
    %v315 = vpop.f32.mrf.mxu0
    %v316 = vadd.f32 %v109, %v315
    %317 = vmatmul.bf16.gmra.mxu0 %v185
    %v318 = vpop.f32.mrf.mxu0
    %v319 = vadd.f32 %v109, %v318
    %v320 = vpop.f32.mrf.mxu0
    %v321 = vadd.f32 %v109, %v320
    %322 = vmatmul.bf16.gmra.mxu0 %v186
    %v323 = vpop.f32.mrf.mxu0
    %v324 = vadd.f32 %v109, %v323
    %v325 = vpop.f32.mrf.mxu0
    %v326 = vadd.f32 %v109, %v325
    %327 = vmatmul.bf16.gmra.mxu0 %v187
    %v328 = vpop.f32.mrf.mxu0
    %v329 = vadd.f32 %v109, %v328
    %v330 = vpop.f32.mrf.mxu0
    %v331 = vadd.f32 %v109, %v330
    %332 = vmatmul.bf16.gmra.mxu0 %v188
    %v333 = vpop.f32.mrf.mxu0
    %v334 = vadd.f32 %v109, %v333
    %v335 = vpop.f32.mrf.mxu0
    %v336 = vadd.f32 %v109, %v335
    %337 = vmatmul.bf16.gmra.mxu0 %v189
    %v338 = vpop.f32.mrf.mxu0
    %v339 = vadd.f32 %v109, %v338
    %v340 = vpop.f32.mrf.mxu0
    %v341 = vadd.f32 %v109, %v340
    %342 = vdwg.mxu0
    %v343 = vmul.f32 %v264, 0.5
    %v344 = vmul.f32 %v266, 0.5
    %v345 = vmul.f32 %v269, 0.5
    %v346 = vmul.f32 %v271, 0.5
    %v347 = vmul.f32 %v274, 0.5
    %v348 = vmul.f32 %v276, 0.5
    %v349 = vmul.f32 %v279, 0.5
    %v350 = vmul.f32 %v281, 0.5
    %v351 = vmul.f32 %v284, 0.5
    %v352 = vmul.f32 %v286, 0.5
    %v353 = vmul.f32 %v289, 0.5
    %v354 = vmul.f32 %v291, 0.5
    %v355 = vmul.f32 %v294, 0.5
    %v356 = vmul.f32 %v296, 0.5
    %v357 = vmul.f32 %v299, 0.5
    %v358 = vmul.f32 %v301, 0.5
    %v359 = vmul.f32 %v304, 0.5
    %v360 = vmul.f32 %v306, 0.5
    %v361 = vmul.f32 %v309, 0.5
    %v362 = vmul.f32 %v311, 0.5
    %v363 = vmul.f32 %v314, 0.5
    %v364 = vmul.f32 %v316, 0.5
    %v365 = vmul.f32 %v319, 0.5
    %v366 = vmul.f32 %v321, 0.5
    %v367 = vmul.f32 %v324, 0.5
    %v368 = vmul.f32 %v326, 0.5
    %v369 = vmul.f32 %v329, 0.5
    %v370 = vmul.f32 %v331, 0.5
    %v371 = vmul.f32 %v334, 0.5
    %v372 = vmul.f32 %v336, 0.5
    %v373 = vmul.f32 %v339, 0.5
    %v374 = vmul.f32 %v341, 0.5
    %v375 = vtanh.pop %v343
    %v376 = vtanh.pop %v344
    %v377 = vtanh.pop %v345
    %v378 = vtanh.pop %v346
    %v379 = vtanh.pop %v347
    %v380 = vtanh.pop %v348
    %v381 = vtanh.pop %v349
    %v382 = vtanh.pop %v350
    %v383 = vtanh.pop %v351
    %v384 = vtanh.pop %v352
    %v385 = vtanh.pop %v353
    %v386 = vtanh.pop %v354
    %v387 = vtanh.pop %v355
    %v388 = vtanh.pop %v356
    %v389 = vtanh.pop %v357
    %v390 = vtanh.pop %v358
    %v391 = vtanh.pop %v359
    %v392 = vtanh.pop %v360
    %v393 = vtanh.pop %v361
    %v394 = vtanh.pop %v362
    %v395 = vtanh.pop %v363
    %v396 = vtanh.pop %v364
    %v397 = vtanh.pop %v365
    %v398 = vtanh.pop %v366
    %v399 = vtanh.pop %v367
    %v400 = vtanh.pop %v368
    %v401 = vtanh.pop %v369
    %v402 = vtanh.pop %v370
    %v403 = vtanh.pop %v371
    %v404 = vtanh.pop %v372
    %v405 = vtanh.pop %v373
    %v406 = vtanh.pop %v374
    %v407 = vmul.f32 %v375, 0.5
    %v408 = vmul.f32 %v376, 0.5
    %v409 = vmul.f32 %v377, 0.5
    %v410 = vmul.f32 %v378, 0.5
    %v411 = vmul.f32 %v379, 0.5
    %v412 = vmul.f32 %v380, 0.5
    %v413 = vmul.f32 %v381, 0.5
    %v414 = vmul.f32 %v382, 0.5
    %v415 = vmul.f32 %v383, 0.5
    %v416 = vmul.f32 %v384, 0.5
    %v417 = vmul.f32 %v385, 0.5
    %v418 = vmul.f32 %v386, 0.5
    %v419 = vmul.f32 %v387, 0.5
    %v420 = vmul.f32 %v388, 0.5
    %v421 = vmul.f32 %v389, 0.5
    %v422 = vmul.f32 %v390, 0.5
    %v423 = vmul.f32 %v391, 0.5
    %v424 = vmul.f32 %v392, 0.5
    %v425 = vmul.f32 %v393, 0.5
    %v426 = vmul.f32 %v394, 0.5
    %v427 = vmul.f32 %v395, 0.5
    %v428 = vmul.f32 %v396, 0.5
    %v429 = vmul.f32 %v397, 0.5
    %v430 = vmul.f32 %v398, 0.5
    %v431 = vmul.f32 %v399, 0.5
    %v432 = vmul.f32 %v400, 0.5
    %v433 = vmul.f32 %v401, 0.5
    %v434 = vmul.f32 %v402, 0.5
    %v435 = vmul.f32 %v403, 0.5
    %v436 = vmul.f32 %v404, 0.5
    %v437 = vmul.f32 %v405, 0.5
    %v438 = vmul.f32 %v406, 0.5
    %v439 = vadd.f32 %v407, 0.5
    %v440 = vadd.f32 %v408, 0.5
    %v441 = vadd.f32 %v409, 0.5
    %v442 = vadd.f32 %v410, 0.5
    %v443 = vadd.f32 %v411, 0.5
    %v444 = vadd.f32 %v412, 0.5
    %v445 = vadd.f32 %v413, 0.5
    %v446 = vadd.f32 %v414, 0.5
    %v447 = vadd.f32 %v415, 0.5
    %v448 = vadd.f32 %v416, 0.5
    %v449 = vadd.f32 %v417, 0.5
    %v450 = vadd.f32 %v418, 0.5
    %v451 = vadd.f32 %v419, 0.5
    %v452 = vadd.f32 %v420, 0.5
    %v453 = vadd.f32 %v421, 0.5
    %v454 = vadd.f32 %v422, 0.5
    %v455 = vadd.f32 %v423, 0.5
    %v456 = vadd.f32 %v424, 0.5
    %v457 = vadd.f32 %v425, 0.5
    %v458 = vadd.f32 %v426, 0.5
    %v459 = vadd.f32 %v427, 0.5
    %v460 = vadd.f32 %v428, 0.5
    %v461 = vadd.f32 %v429, 0.5
    %v462 = vadd.f32 %v430, 0.5
    %v463 = vadd.f32 %v431, 0.5
    %v464 = vadd.f32 %v432, 0.5
    %v465 = vadd.f32 %v433, 0.5
    %v466 = vadd.f32 %v434, 0.5
    %v467 = vadd.f32 %v435, 0.5
    %v468 = vadd.f32 %v436, 0.5
    %v469 = vadd.f32 %v437, 0.5
    %v470 = vadd.f32 %v438, 0.5
    %v471 = vpack.c.bf16 %v440, %v439
    %v472 = vpack.c.bf16 %v442, %v441
    %v473 = vpack.c.bf16 %v444, %v443
    %v474 = vpack.c.bf16 %v446, %v445
    %v475 = vpack.c.bf16 %v448, %v447
    %v476 = vpack.c.bf16 %v450, %v449
    %v477 = vpack.c.bf16 %v452, %v451
    %v478 = vpack.c.bf16 %v454, %v453
    %v479 = vpack.c.bf16 %v456, %v455
    %v480 = vpack.c.bf16 %v458, %v457
    %v481 = vpack.c.bf16 %v460, %v459
    %v482 = vpack.c.bf16 %v462, %v461
    %v483 = vpack.c.bf16 %v464, %v463
    %v484 = vpack.c.bf16 %v466, %v465
    %v485 = vpack.c.bf16 %v468, %v467
    %v486 = vpack.c.bf16 %v470, %v469
    %s487 = scalar_lea.vmem [#allocation5], 64
    %v488 = vld [vmem:[%s487] sm:$0xf]
    %v489 = vld [vmem:[%s487 + $0x4] sm:$0xf]
    %v490 = vld [vmem:[%s487 + $0x8] sm:$0xf]
    %v491 = vld [vmem:[%s487 + $0xc] sm:$0xf]
    %v492 = vld [vmem:[%s487 + $0x10] sm:$0xf]
    %v493 = vld [vmem:[%s487 + $0x14] sm:$0xf]
    %v494 = vld [vmem:[%s487 + $0x18] sm:$0xf]
    %v495 = vld [vmem:[%s487 + $0x1c] sm:$0xf]
    %v496 = vld [vmem:[%s487 + $0x20] sm:$0xf]
    %v497 = vld [vmem:[%s487 + $0x24] sm:$0xf]
    %v498 = vld [vmem:[%s487 + $0x28] sm:$0xf]
    %v499 = vld [vmem:[%s487 + $0x2c] sm:$0xf]
    %v500 = vld [vmem:[%s487 + $0x30] sm:$0xf]
    %v501 = vld [vmem:[%s487 + $0x34] sm:$0xf]
    %v502 = vld [vmem:[%s487 + $0x38] sm:$0xf]
    %v503 = vld [vmem:[%s487 + $0x3c] sm:$0xf]
    %v504 = vld [vmem:[#allocation7 + $0x1] sm:$0x1]
    %v505 = vperm.slane %v504, 0
    %v522 = vunpack.c.l.b16 %v488
    %v523 = vunpack.c.l.b16 %v489
    %v524 = vunpack.c.l.b16 %v490
    %v525 = vunpack.c.l.b16 %v491
    %v526 = vunpack.c.l.b16 %v492
    %v527 = vunpack.c.l.b16 %v493
    %v528 = vunpack.c.l.b16 %v494
    %v529 = vunpack.c.l.b16 %v495
    %v530 = vunpack.c.l.b16 %v496
    %v531 = vunpack.c.l.b16 %v497
    %v532 = vunpack.c.l.b16 %v498
    %v533 = vunpack.c.l.b16 %v499
    %v534 = vunpack.c.l.b16 %v500
    %v535 = vunpack.c.l.b16 %v501
    %v536 = vunpack.c.l.b16 %v502
    %v537 = vunpack.c.l.b16 %v503
    %v538 = vpack.c.b16 %v523, %v522
    %v539 = vpack.c.b16 %v525, %v524
    %v540 = vpack.c.b16 %v527, %v526
    %v541 = vpack.c.b16 %v529, %v528
    %v542 = vpack.c.b16 %v531, %v530
    %v543 = vpack.c.b16 %v533, %v532
    %v544 = vpack.c.b16 %v535, %v534
    %v545 = vpack.c.b16 %v537, %v536
    %554 = vmatpush.bf16.msra.mxu0 %v545
    %555 = vmatpush.bf16.msra.mxu0 %v544
    %556 = vmatpush.bf16.msra.mxu0 %v543
    %557 = vmatpush.bf16.msra.mxu0 %v542
    %558 = vmatpush.bf16.msra.mxu0 %v541
    %559 = vmatpush.bf16.msra.mxu0 %v540
    %560 = vmatpush.bf16.msra.mxu0 %v539
    %561 = vmatpush.bf16.msra.mxu0 %v538
    %562 = vmatmul.bf16.gmra.mxu0 %v471
    %v563 = vpop.f32.mrf.mxu0
    %v564 = vadd.f32 %v505, %v563
    %v565 = vpop.f32.mrf.mxu0
    %v566 = vadd.f32 %v505, %v565
    %567 = vmatmul.bf16.gmra.mxu0 %v472
    %v568 = vpop.f32.mrf.mxu0
    %v569 = vadd.f32 %v505, %v568
    %v570 = vpop.f32.mrf.mxu0
    %v571 = vadd.f32 %v505, %v570
    %572 = vmatmul.bf16.gmra.mxu0 %v473
    %v573 = vpop.f32.mrf.mxu0
    %v574 = vadd.f32 %v505, %v573
    %v575 = vpop.f32.mrf.mxu0
    %v576 = vadd.f32 %v505, %v575
    %577 = vmatmul.bf16.gmra.mxu0 %v474
    %v578 = vpop.f32.mrf.mxu0
    %v579 = vadd.f32 %v505, %v578
    %v580 = vpop.f32.mrf.mxu0
    %v581 = vadd.f32 %v505, %v580
    %582 = vmatmul.bf16.gmra.mxu0 %v475
    %v583 = vpop.f32.mrf.mxu0
    %v584 = vadd.f32 %v505, %v583
    %v585 = vpop.f32.mrf.mxu0
    %v586 = vadd.f32 %v505, %v585
    %587 = vmatmul.bf16.gmra.mxu0 %v476
    %v588 = vpop.f32.mrf.mxu0
    %v589 = vadd.f32 %v505, %v588
    %v590 = vpop.f32.mrf.mxu0
    %v591 = vadd.f32 %v505, %v590
    %592 = vmatmul.bf16.gmra.mxu0 %v477
    %v593 = vpop.f32.mrf.mxu0
    %v594 = vadd.f32 %v505, %v593
    %v595 = vpop.f32.mrf.mxu0
    %v596 = vadd.f32 %v505, %v595
    %597 = vmatmul.bf16.gmra.mxu0 %v478
    %v598 = vpop.f32.mrf.mxu0
    %v599 = vadd.f32 %v505, %v598
    %v600 = vpop.f32.mrf.mxu0
    %v601 = vadd.f32 %v505, %v600
    %602 = vmatmul.bf16.gmra.mxu0 %v479
    %v603 = vpop.f32.mrf.mxu0
    %v604 = vadd.f32 %v505, %v603
    %v605 = vpop.f32.mrf.mxu0
    %v606 = vadd.f32 %v505, %v605
    %607 = vmatmul.bf16.gmra.mxu0 %v480
    %v608 = vpop.f32.mrf.mxu0
    %v609 = vadd.f32 %v505, %v608
    %v610 = vpop.f32.mrf.mxu0
    %v611 = vadd.f32 %v505, %v610
    %612 = vmatmul.bf16.gmra.mxu0 %v481
    %v613 = vpop.f32.mrf.mxu0
    %v614 = vadd.f32 %v505, %v613
    %v615 = vpop.f32.mrf.mxu0
    %v616 = vadd.f32 %v505, %v615
    %617 = vmatmul.bf16.gmra.mxu0 %v482
    %v618 = vpop.f32.mrf.mxu0
    %v619 = vadd.f32 %v505, %v618
    %v620 = vpop.f32.mrf.mxu0
    %v621 = vadd.f32 %v505, %v620
    %622 = vmatmul.bf16.gmra.mxu0 %v483
    %v623 = vpop.f32.mrf.mxu0
    %v624 = vadd.f32 %v505, %v623
    %v625 = vpop.f32.mrf.mxu0
    %v626 = vadd.f32 %v505, %v625
    %627 = vmatmul.bf16.gmra.mxu0 %v484
    %v628 = vpop.f32.mrf.mxu0
    %v629 = vadd.f32 %v505, %v628
    %v630 = vpop.f32.mrf.mxu0
    %v631 = vadd.f32 %v505, %v630
    %632 = vmatmul.bf16.gmra.mxu0 %v485
    %v633 = vpop.f32.mrf.mxu0
    %v634 = vadd.f32 %v505, %v633
    %v635 = vpop.f32.mrf.mxu0
    %v636 = vadd.f32 %v505, %v635
    %637 = vmatmul.bf16.gmra.mxu0 %v486
    %v638 = vpop.f32.mrf.mxu0
    %v639 = vadd.f32 %v505, %v638
    %v640 = vpop.f32.mrf.mxu0
    %v641 = vadd.f32 %v505, %v640
    %642 = vdwg.mxu0
    %v643 = vmul.f32 %v564, 0.5
    %v644 = vmul.f32 %v566, 0.5
    %v645 = vmul.f32 %v569, 0.5
    %v646 = vmul.f32 %v571, 0.5
    %v647 = vmul.f32 %v574, 0.5
    %v648 = vmul.f32 %v576, 0.5
    %v649 = vmul.f32 %v579, 0.5
    %v650 = vmul.f32 %v581, 0.5
    %v651 = vmul.f32 %v584, 0.5
    %v652 = vmul.f32 %v586, 0.5
    %v653 = vmul.f32 %v589, 0.5
    %v654 = vmul.f32 %v591, 0.5
    %v655 = vmul.f32 %v594, 0.5
    %v656 = vmul.f32 %v596, 0.5
    %v657 = vmul.f32 %v599, 0.5
    %v658 = vmul.f32 %v601, 0.5
    %v659 = vmul.f32 %v604, 0.5
    %v660 = vmul.f32 %v606, 0.5
    %v661 = vmul.f32 %v609, 0.5
    %v662 = vmul.f32 %v611, 0.5
    %v663 = vmul.f32 %v614, 0.5
    %v664 = vmul.f32 %v616, 0.5
    %v665 = vmul.f32 %v619, 0.5
    %v666 = vmul.f32 %v621, 0.5
    %v667 = vmul.f32 %v624, 0.5
    %v668 = vmul.f32 %v626, 0.5
    %v669 = vmul.f32 %v629, 0.5
    %v670 = vmul.f32 %v631, 0.5
    %v671 = vmul.f32 %v634, 0.5
    %v672 = vmul.f32 %v636, 0.5
    %v673 = vmul.f32 %v639, 0.5
    %v674 = vmul.f32 %v641, 0.5
    %v675 = vtanh.pop %v643
    %v676 = vtanh.pop %v644
    %v677 = vtanh.pop %v645
    %v678 = vtanh.pop %v646
    %v679 = vtanh.pop %v647
    %v680 = vtanh.pop %v648
    %v681 = vtanh.pop %v649
    %v682 = vtanh.pop %v650
    %v683 = vtanh.pop %v651
    %v684 = vtanh.pop %v652
    %v685 = vtanh.pop %v653
    %v686 = vtanh.pop %v654
    %v687 = vtanh.pop %v655
    %v688 = vtanh.pop %v656
    %v689 = vtanh.pop %v657
    %v690 = vtanh.pop %v658
    %v691 = vtanh.pop %v659
    %v692 = vtanh.pop %v660
    %v693 = vtanh.pop %v661
    %v694 = vtanh.pop %v662
    %v695 = vtanh.pop %v663
    %v696 = vtanh.pop %v664
    %v697 = vtanh.pop %v665
    %v698 = vtanh.pop %v666
    %v699 = vtanh.pop %v667
    %v700 = vtanh.pop %v668
    %v701 = vtanh.pop %v669
    %v702 = vtanh.pop %v670
    %v703 = vtanh.pop %v671
    %v704 = vtanh.pop %v672
    %v705 = vtanh.pop %v673
    %v706 = vtanh.pop %v674
    %v707 = vmul.f32 %v675, 0.5
    %v708 = vmul.f32 %v676, 0.5
    %v709 = vmul.f32 %v677, 0.5
    %v710 = vmul.f32 %v678, 0.5
    %v711 = vmul.f32 %v679, 0.5
    %v712 = vmul.f32 %v680, 0.5
    %v713 = vmul.f32 %v681, 0.5
    %v714 = vmul.f32 %v682, 0.5
    %v715 = vmul.f32 %v683, 0.5
    %v716 = vmul.f32 %v684, 0.5
    %v717 = vmul.f32 %v685, 0.5
    %v718 = vmul.f32 %v686, 0.5
    %v719 = vmul.f32 %v687, 0.5
    %v720 = vmul.f32 %v688, 0.5
    %v721 = vmul.f32 %v689, 0.5
    %v722 = vmul.f32 %v690, 0.5
    %v723 = vmul.f32 %v691, 0.5
    %v724 = vmul.f32 %v692, 0.5
    %v725 = vmul.f32 %v693, 0.5
    %v726 = vmul.f32 %v694, 0.5
    %v727 = vmul.f32 %v695, 0.5
    %v728 = vmul.f32 %v696, 0.5
    %v729 = vmul.f32 %v697, 0.5
    %v730 = vmul.f32 %v698, 0.5
    %v731 = vmul.f32 %v699, 0.5
    %v732 = vmul.f32 %v700, 0.5
    %v733 = vmul.f32 %v701, 0.5
    %v734 = vmul.f32 %v702, 0.5
    %v735 = vmul.f32 %v703, 0.5
    %v736 = vmul.f32 %v704, 0.5
    %v737 = vmul.f32 %v705, 0.5
    %v738 = vmul.f32 %v706, 0.5
    %v739 = vadd.f32 %v707, 0.5
    %v740 = vadd.f32 %v708, 0.5
    %v741 = vadd.f32 %v709, 0.5
    %v742 = vadd.f32 %v710, 0.5
    %v743 = vadd.f32 %v711, 0.5
    %v744 = vadd.f32 %v712, 0.5
    %v745 = vadd.f32 %v713, 0.5
    %v746 = vadd.f32 %v714, 0.5
    %v747 = vadd.f32 %v715, 0.5
    %v748 = vadd.f32 %v716, 0.5
    %v749 = vadd.f32 %v717, 0.5
    %v750 = vadd.f32 %v718, 0.5
    %v751 = vadd.f32 %v719, 0.5
    %v752 = vadd.f32 %v720, 0.5
    %v753 = vadd.f32 %v721, 0.5
    %v754 = vadd.f32 %v722, 0.5
    %v755 = vadd.f32 %v723, 0.5
    %v756 = vadd.f32 %v724, 0.5
    %v757 = vadd.f32 %v725, 0.5
    %v758 = vadd.f32 %v726, 0.5
    %v759 = vadd.f32 %v727, 0.5
    %v760 = vadd.f32 %v728, 0.5
    %v761 = vadd.f32 %v729, 0.5
    %v762 = vadd.f32 %v730, 0.5
    %v763 = vadd.f32 %v731, 0.5
    %v764 = vadd.f32 %v732, 0.5
    %v765 = vadd.f32 %v733, 0.5
    %v766 = vadd.f32 %v734, 0.5
    %v767 = vadd.f32 %v735, 0.5
    %v768 = vadd.f32 %v736, 0.5
    %v769 = vadd.f32 %v737, 0.5
    %v770 = vadd.f32 %v738, 0.5
    %v771 = vpack.c.bf16 %v740, %v739
    %v772 = vpack.c.bf16 %v742, %v741
    %v773 = vpack.c.bf16 %v744, %v743
    %v774 = vpack.c.bf16 %v746, %v745
    %v775 = vpack.c.bf16 %v748, %v747
    %v776 = vpack.c.bf16 %v750, %v749
    %v777 = vpack.c.bf16 %v752, %v751
    %v778 = vpack.c.bf16 %v754, %v753
    %v779 = vpack.c.bf16 %v756, %v755
    %v780 = vpack.c.bf16 %v758, %v757
    %v781 = vpack.c.bf16 %v760, %v759
    %v782 = vpack.c.bf16 %v762, %v761
    %v783 = vpack.c.bf16 %v764, %v763
    %v784 = vpack.c.bf16 %v766, %v765
    %v785 = vpack.c.bf16 %v768, %v767
    %v786 = vpack.c.bf16 %v770, %v769
    %s787 = scalar_lea.vmem [#allocation5], 128
    %v788 = vld [vmem:[%s787] sm:$0xf]
    %v789 = vld [vmem:[%s787 + $0x4] sm:$0xf]
    %v790 = vld [vmem:[%s787 + $0x8] sm:$0xf]
    %v791 = vld [vmem:[%s787 + $0xc] sm:$0xf]
    %v792 = vld [vmem:[%s787 + $0x10] sm:$0xf]
    %v793 = vld [vmem:[%s787 + $0x14] sm:$0xf]
    %v794 = vld [vmem:[%s787 + $0x18] sm:$0xf]
    %v795 = vld [vmem:[%s787 + $0x1c] sm:$0xf]
    %v796 = vld [vmem:[%s787 + $0x20] sm:$0xf]
    %v797 = vld [vmem:[%s787 + $0x24] sm:$0xf]
    %v798 = vld [vmem:[%s787 + $0x28] sm:$0xf]
    %v799 = vld [vmem:[%s787 + $0x2c] sm:$0xf]
    %v800 = vld [vmem:[%s787 + $0x30] sm:$0xf]
    %v801 = vld [vmem:[%s787 + $0x34] sm:$0xf]
    %v802 = vld [vmem:[%s787 + $0x38] sm:$0xf]
    %v803 = vld [vmem:[%s787 + $0x3c] sm:$0xf]
    %v804 = vld [vmem:[#allocation7 + $0x2] sm:$0x1]
    %v805 = vperm.slane %v804, 0
    %v822 = vunpack.c.l.b16 %v788
    %v823 = vunpack.c.l.b16 %v789
    %v824 = vunpack.c.l.b16 %v790
    %v825 = vunpack.c.l.b16 %v791
    %v826 = vunpack.c.l.b16 %v792
    %v827 = vunpack.c.l.b16 %v793
    %v828 = vunpack.c.l.b16 %v794
    %v829 = vunpack.c.l.b16 %v795
    %v830 = vunpack.c.l.b16 %v796
    %v831 = vunpack.c.l.b16 %v797
    %v832 = vunpack.c.l.b16 %v798
    %v833 = vunpack.c.l.b16 %v799
    %v834 = vunpack.c.l.b16 %v800
    %v835 = vunpack.c.l.b16 %v801
    %v836 = vunpack.c.l.b16 %v802
    %v837 = vunpack.c.l.b16 %v803
    %v838 = vpack.c.b16 %v823, %v822
    %v839 = vpack.c.b16 %v825, %v824
    %v840 = vpack.c.b16 %v827, %v826
    %v841 = vpack.c.b16 %v829, %v828
    %v842 = vpack.c.b16 %v831, %v830
    %v843 = vpack.c.b16 %v833, %v832
    %v844 = vpack.c.b16 %v835, %v834
    %v845 = vpack.c.b16 %v837, %v836
    %854 = vmatpush.bf16.msra.mxu0 %v845
    %855 = vmatpush.bf16.msra.mxu0 %v844
    %856 = vmatpush.bf16.msra.mxu0 %v843
    %857 = vmatpush.bf16.msra.mxu0 %v842
    %858 = vmatpush.bf16.msra.mxu0 %v841
    %859 = vmatpush.bf16.msra.mxu0 %v840
    %860 = vmatpush.bf16.msra.mxu0 %v839
    %861 = vmatpush.bf16.msra.mxu0 %v838
    %862 = vmatmul.bf16.gmra.mxu0 %v771
    %v863 = vpop.f32.mrf.mxu0
    %v864 = vadd.f32 %v805, %v863
    %v865 = vpop.f32.mrf.mxu0
    %v866 = vadd.f32 %v805, %v865
    %867 = vmatmul.bf16.gmra.mxu0 %v772
    %v868 = vpop.f32.mrf.mxu0
    %v869 = vadd.f32 %v805, %v868
    %v870 = vpop.f32.mrf.mxu0
    %v871 = vadd.f32 %v805, %v870
    %872 = vmatmul.bf16.gmra.mxu0 %v773
    %v873 = vpop.f32.mrf.mxu0
    %v874 = vadd.f32 %v805, %v873
    %v875 = vpop.f32.mrf.mxu0
    %v876 = vadd.f32 %v805, %v875
    %877 = vmatmul.bf16.gmra.mxu0 %v774
    %v878 = vpop.f32.mrf.mxu0
    %v879 = vadd.f32 %v805, %v878
    %v880 = vpop.f32.mrf.mxu0
    %v881 = vadd.f32 %v805, %v880
    %882 = vmatmul.bf16.gmra.mxu0 %v775
    %v883 = vpop.f32.mrf.mxu0
    %v884 = vadd.f32 %v805, %v883
    %v885 = vpop.f32.mrf.mxu0
    %v886 = vadd.f32 %v805, %v885
    %887 = vmatmul.bf16.gmra.mxu0 %v776
    %v888 = vpop.f32.mrf.mxu0
    %v889 = vadd.f32 %v805, %v888
    %v890 = vpop.f32.mrf.mxu0
    %v891 = vadd.f32 %v805, %v890
    %892 = vmatmul.bf16.gmra.mxu0 %v777
    %v893 = vpop.f32.mrf.mxu0
    %v894 = vadd.f32 %v805, %v893
    %v895 = vpop.f32.mrf.mxu0
    %v896 = vadd.f32 %v805, %v895
    %897 = vmatmul.bf16.gmra.mxu0 %v778
    %v898 = vpop.f32.mrf.mxu0
    %v899 = vadd.f32 %v805, %v898
    %v900 = vpop.f32.mrf.mxu0
    %v901 = vadd.f32 %v805, %v900
    %902 = vmatmul.bf16.gmra.mxu0 %v779
    %v903 = vpop.f32.mrf.mxu0
    %v904 = vadd.f32 %v805, %v903
    %v905 = vpop.f32.mrf.mxu0
    %v906 = vadd.f32 %v805, %v905
    %907 = vmatmul.bf16.gmra.mxu0 %v780
    %v908 = vpop.f32.mrf.mxu0
    %v909 = vadd.f32 %v805, %v908
    %v910 = vpop.f32.mrf.mxu0
    %v911 = vadd.f32 %v805, %v910
    %912 = vmatmul.bf16.gmra.mxu0 %v781
    %v913 = vpop.f32.mrf.mxu0
    %v914 = vadd.f32 %v805, %v913
    %v915 = vpop.f32.mrf.mxu0
    %v916 = vadd.f32 %v805, %v915
    %917 = vmatmul.bf16.gmra.mxu0 %v782
    %v918 = vpop.f32.mrf.mxu0
    %v919 = vadd.f32 %v805, %v918
    %v920 = vpop.f32.mrf.mxu0
    %v921 = vadd.f32 %v805, %v920
    %922 = vmatmul.bf16.gmra.mxu0 %v783
    %v923 = vpop.f32.mrf.mxu0
    %v924 = vadd.f32 %v805, %v923
    %v925 = vpop.f32.mrf.mxu0
    %v926 = vadd.f32 %v805, %v925
    %927 = vmatmul.bf16.gmra.mxu0 %v784
    %v928 = vpop.f32.mrf.mxu0
    %v929 = vadd.f32 %v805, %v928
    %v930 = vpop.f32.mrf.mxu0
    %v931 = vadd.f32 %v805, %v930
    %932 = vmatmul.bf16.gmra.mxu0 %v785
    %v933 = vpop.f32.mrf.mxu0
    %v934 = vadd.f32 %v805, %v933
    %v935 = vpop.f32.mrf.mxu0
    %v936 = vadd.f32 %v805, %v935
    %937 = vmatmul.bf16.gmra.mxu0 %v786
    %v938 = vpop.f32.mrf.mxu0
    %v939 = vadd.f32 %v805, %v938
    %v940 = vpop.f32.mrf.mxu0
    %v941 = vadd.f32 %v805, %v940
    %942 = vdwg.mxu0
    %v943 = vmul.f32 %v864, 0.5
    %v944 = vmul.f32 %v866, 0.5
    %v945 = vmul.f32 %v869, 0.5
    %v946 = vmul.f32 %v871, 0.5
    %v947 = vmul.f32 %v874, 0.5
    %v948 = vmul.f32 %v876, 0.5
    %v949 = vmul.f32 %v879, 0.5
    %v950 = vmul.f32 %v881, 0.5
    %v951 = vmul.f32 %v884, 0.5
    %v952 = vmul.f32 %v886, 0.5
    %v953 = vmul.f32 %v889, 0.5
    %v954 = vmul.f32 %v891, 0.5
    %v955 = vmul.f32 %v894, 0.5
    %v956 = vmul.f32 %v896, 0.5
    %v957 = vmul.f32 %v899, 0.5
    %v958 = vmul.f32 %v901, 0.5
    %v959 = vmul.f32 %v904, 0.5
    %v960 = vmul.f32 %v906, 0.5
    %v961 = vmul.f32 %v909, 0.5
    %v962 = vmul.f32 %v911, 0.5
    %v963 = vmul.f32 %v914, 0.5
    %v964 = vmul.f32 %v916, 0.5
    %v965 = vmul.f32 %v919, 0.5
    %v966 = vmul.f32 %v921, 0.5
    %v967 = vmul.f32 %v924, 0.5
    %v968 = vmul.f32 %v926, 0.5
    %v969 = vmul.f32 %v929, 0.5
    %v970 = vmul.f32 %v931, 0.5
    %v971 = vmul.f32 %v934, 0.5
    %v972 = vmul.f32 %v936, 0.5
    %v973 = vmul.f32 %v939, 0.5
    %v974 = vmul.f32 %v941, 0.5
    %v975 = vtanh.pop %v943
    %v976 = vtanh.pop %v944
    %v977 = vtanh.pop %v945
    %v978 = vtanh.pop %v946
    %v979 = vtanh.pop %v947
    %v980 = vtanh.pop %v948
    %v981 = vtanh.pop %v949
    %v982 = vtanh.pop %v950
    %v983 = vtanh.pop %v951
    %v984 = vtanh.pop %v952
    %v985 = vtanh.pop %v953
    %v986 = vtanh.pop %v954
    %v987 = vtanh.pop %v955
    %v988 = vtanh.pop %v956
    %v989 = vtanh.pop %v957
    %v990 = vtanh.pop %v958
    %v991 = vtanh.pop %v959
    %v992 = vtanh.pop %v960
    %v993 = vtanh.pop %v961
    %v994 = vtanh.pop %v962
    %v995 = vtanh.pop %v963
    %v996 = vtanh.pop %v964
    %v997 = vtanh.pop %v965
    %v998 = vtanh.pop %v966
    %v999 = vtanh.pop %v967
    %v1000 = vtanh.pop %v968
    %v1001 = vtanh.pop %v969
    %v1002 = vtanh.pop %v970
    %v1003 = vtanh.pop %v971
    %v1004 = vtanh.pop %v972
    %v1005 = vtanh.pop %v973
    %v1006 = vtanh.pop %v974
    %v1007 = vmul.f32 %v975, 0.5
    %v1008 = vmul.f32 %v976, 0.5
    %v1009 = vmul.f32 %v977, 0.5
    %v1010 = vmul.f32 %v978, 0.5
    %v1011 = vmul.f32 %v979, 0.5
    %v1012 = vmul.f32 %v980, 0.5
    %v1013 = vmul.f32 %v981, 0.5
    %v1014 = vmul.f32 %v982, 0.5
    %v1015 = vmul.f32 %v983, 0.5
    %v1016 = vmul.f32 %v984, 0.5
    %v1017 = vmul.f32 %v985, 0.5
    %v1018 = vmul.f32 %v986, 0.5
    %v1019 = vmul.f32 %v987, 0.5
    %v1020 = vmul.f32 %v988, 0.5
    %v1021 = vmul.f32 %v989, 0.5
    %v1022 = vmul.f32 %v990, 0.5
    %v1023 = vmul.f32 %v991, 0.5
    %v1024 = vmul.f32 %v992, 0.5
    %v1025 = vmul.f32 %v993, 0.5
    %v1026 = vmul.f32 %v994, 0.5
    %v1027 = vmul.f32 %v995, 0.5
    %v1028 = vmul.f32 %v996, 0.5
    %v1029 = vmul.f32 %v997, 0.5
    %v1030 = vmul.f32 %v998, 0.5
    %v1031 = vmul.f32 %v999, 0.5
    %v1032 = vmul.f32 %v1000, 0.5
    %v1033 = vmul.f32 %v1001, 0.5
    %v1034 = vmul.f32 %v1002, 0.5
    %v1035 = vmul.f32 %v1003, 0.5
    %v1036 = vmul.f32 %v1004, 0.5
    %v1037 = vmul.f32 %v1005, 0.5
    %v1038 = vmul.f32 %v1006, 0.5
    %v1039 = vadd.f32 %v1007, 0.5
    %v1040 = vadd.f32 %v1008, 0.5
    %v1041 = vadd.f32 %v1009, 0.5
    %v1042 = vadd.f32 %v1010, 0.5
    %v1043 = vadd.f32 %v1011, 0.5
    %v1044 = vadd.f32 %v1012, 0.5
    %v1045 = vadd.f32 %v1013, 0.5
    %v1046 = vadd.f32 %v1014, 0.5
    %v1047 = vadd.f32 %v1015, 0.5
    %v1048 = vadd.f32 %v1016, 0.5
    %v1049 = vadd.f32 %v1017, 0.5
    %v1050 = vadd.f32 %v1018, 0.5
    %v1051 = vadd.f32 %v1019, 0.5
    %v1052 = vadd.f32 %v1020, 0.5
    %v1053 = vadd.f32 %v1021, 0.5
    %v1054 = vadd.f32 %v1022, 0.5
    %v1055 = vadd.f32 %v1023, 0.5
    %v1056 = vadd.f32 %v1024, 0.5
    %v1057 = vadd.f32 %v1025, 0.5
    %v1058 = vadd.f32 %v1026, 0.5
    %v1059 = vadd.f32 %v1027, 0.5
    %v1060 = vadd.f32 %v1028, 0.5
    %v1061 = vadd.f32 %v1029, 0.5
    %v1062 = vadd.f32 %v1030, 0.5
    %v1063 = vadd.f32 %v1031, 0.5
    %v1064 = vadd.f32 %v1032, 0.5
    %v1065 = vadd.f32 %v1033, 0.5
    %v1066 = vadd.f32 %v1034, 0.5
    %v1067 = vadd.f32 %v1035, 0.5
    %v1068 = vadd.f32 %v1036, 0.5
    %v1069 = vadd.f32 %v1037, 0.5
    %v1070 = vadd.f32 %v1038, 0.5
    %v1071 = vpack.c.bf16 %v1040, %v1039
    %v1072 = vpack.c.bf16 %v1042, %v1041
    %v1073 = vpack.c.bf16 %v1044, %v1043
    %v1074 = vpack.c.bf16 %v1046, %v1045
    %v1075 = vpack.c.bf16 %v1048, %v1047
    %v1076 = vpack.c.bf16 %v1050, %v1049
    %v1077 = vpack.c.bf16 %v1052, %v1051
    %v1078 = vpack.c.bf16 %v1054, %v1053
    %v1079 = vpack.c.bf16 %v1056, %v1055
    %v1080 = vpack.c.bf16 %v1058, %v1057
    %v1081 = vpack.c.bf16 %v1060, %v1059
    %v1082 = vpack.c.bf16 %v1062, %v1061
    %v1083 = vpack.c.bf16 %v1064, %v1063
    %v1084 = vpack.c.bf16 %v1066, %v1065
    %v1085 = vpack.c.bf16 %v1068, %v1067
    %v1086 = vpack.c.bf16 %v1070, %v1069
    %s1087 = scalar_lea.vmem [#allocation5], 192
    %v1088 = vld [vmem:[%s1087] sm:$0xf]
    %v1089 = vld [vmem:[%s1087 + $0x4] sm:$0xf]
    %v1090 = vld [vmem:[%s1087 + $0x8] sm:$0xf]
    %v1091 = vld [vmem:[%s1087 + $0xc] sm:$0xf]
    %v1092 = vld [vmem:[%s1087 + $0x10] sm:$0xf]
    %v1093 = vld [vmem:[%s1087 + $0x14] sm:$0xf]
    %v1094 = vld [vmem:[%s1087 + $0x18] sm:$0xf]
    %v1095 = vld [vmem:[%s1087 + $0x1c] sm:$0xf]
    %v1096 = vld [vmem:[%s1087 + $0x20] sm:$0xf]
    %v1097 = vld [vmem:[%s1087 + $0x24] sm:$0xf]
    %v1098 = vld [vmem:[%s1087 + $0x28] sm:$0xf]
    %v1099 = vld [vmem:[%s1087 + $0x2c] sm:$0xf]
    %v1100 = vld [vmem:[%s1087 + $0x30] sm:$0xf]
    %v1101 = vld [vmem:[%s1087 + $0x34] sm:$0xf]
    %v1102 = vld [vmem:[%s1087 + $0x38] sm:$0xf]
    %v1103 = vld [vmem:[%s1087 + $0x3c] sm:$0xf]
    %v1104 = vld [vmem:[#allocation7 + $0x3] sm:$0x1]
    %v1105 = vperm.slane %v1104, 0
    %v1122 = vunpack.c.l.b16 %v1088
    %v1123 = vunpack.c.l.b16 %v1089
    %v1124 = vunpack.c.l.b16 %v1090
    %v1125 = vunpack.c.l.b16 %v1091
    %v1126 = vunpack.c.l.b16 %v1092
    %v1127 = vunpack.c.l.b16 %v1093
    %v1128 = vunpack.c.l.b16 %v1094
    %v1129 = vunpack.c.l.b16 %v1095
    %v1130 = vunpack.c.l.b16 %v1096
    %v1131 = vunpack.c.l.b16 %v1097
    %v1132 = vunpack.c.l.b16 %v1098
    %v1133 = vunpack.c.l.b16 %v1099
    %v1134 = vunpack.c.l.b16 %v1100
    %v1135 = vunpack.c.l.b16 %v1101
    %v1136 = vunpack.c.l.b16 %v1102
    %v1137 = vunpack.c.l.b16 %v1103
    %v1138 = vpack.c.b16 %v1123, %v1122
    %v1139 = vpack.c.b16 %v1125, %v1124
    %v1140 = vpack.c.b16 %v1127, %v1126
    %v1141 = vpack.c.b16 %v1129, %v1128
    %v1142 = vpack.c.b16 %v1131, %v1130
    %v1143 = vpack.c.b16 %v1133, %v1132
    %v1144 = vpack.c.b16 %v1135, %v1134
    %v1145 = vpack.c.b16 %v1137, %v1136
    %1154 = vmatpush.bf16.msra.mxu0 %v1145
    %1155 = vmatpush.bf16.msra.mxu0 %v1144
    %1156 = vmatpush.bf16.msra.mxu0 %v1143
    %1157 = vmatpush.bf16.msra.mxu0 %v1142
    %1158 = vmatpush.bf16.msra.mxu0 %v1141
    %1159 = vmatpush.bf16.msra.mxu0 %v1140
    %1160 = vmatpush.bf16.msra.mxu0 %v1139
    %1161 = vmatpush.bf16.msra.mxu0 %v1138
    %1162 = vmatmul.bf16.gmra.mxu0 %v1071
    %v1163 = vpop.f32.mrf.mxu0
    %v1164 = vadd.f32 %v1105, %v1163
    %v1165 = vpop.f32.mrf.mxu0
    %v1166 = vadd.f32 %v1105, %v1165
    %1167 = vmatmul.bf16.gmra.mxu0 %v1072
    %v1168 = vpop.f32.mrf.mxu0
    %v1169 = vadd.f32 %v1105, %v1168
    %v1170 = vpop.f32.mrf.mxu0
    %v1171 = vadd.f32 %v1105, %v1170
    %1172 = vmatmul.bf16.gmra.mxu0 %v1073
    %v1173 = vpop.f32.mrf.mxu0
    %v1174 = vadd.f32 %v1105, %v1173
    %v1175 = vpop.f32.mrf.mxu0
    %v1176 = vadd.f32 %v1105, %v1175
    %1177 = vmatmul.bf16.gmra.mxu0 %v1074
    %v1178 = vpop.f32.mrf.mxu0
    %v1179 = vadd.f32 %v1105, %v1178
    %v1180 = vpop.f32.mrf.mxu0
    %v1181 = vadd.f32 %v1105, %v1180
    %1182 = vmatmul.bf16.gmra.mxu0 %v1075
    %v1183 = vpop.f32.mrf.mxu0
    %v1184 = vadd.f32 %v1105, %v1183
    %v1185 = vpop.f32.mrf.mxu0
    %v1186 = vadd.f32 %v1105, %v1185
    %1187 = vmatmul.bf16.gmra.mxu0 %v1076
    %v1188 = vpop.f32.mrf.mxu0
    %v1189 = vadd.f32 %v1105, %v1188
    %v1190 = vpop.f32.mrf.mxu0
    %v1191 = vadd.f32 %v1105, %v1190
    %1192 = vmatmul.bf16.gmra.mxu0 %v1077
    %v1193 = vpop.f32.mrf.mxu0
    %v1194 = vadd.f32 %v1105, %v1193
    %v1195 = vpop.f32.mrf.mxu0
    %v1196 = vadd.f32 %v1105, %v1195
    %1197 = vmatmul.bf16.gmra.mxu0 %v1078
    %v1198 = vpop.f32.mrf.mxu0
    %v1199 = vadd.f32 %v1105, %v1198
    %v1200 = vpop.f32.mrf.mxu0
    %v1201 = vadd.f32 %v1105, %v1200
    %1202 = vmatmul.bf16.gmra.mxu0 %v1079
    %v1203 = vpop.f32.mrf.mxu0
    %v1204 = vadd.f32 %v1105, %v1203
    %v1205 = vpop.f32.mrf.mxu0
    %v1206 = vadd.f32 %v1105, %v1205
    %1207 = vmatmul.bf16.gmra.mxu0 %v1080
    %v1208 = vpop.f32.mrf.mxu0
    %v1209 = vadd.f32 %v1105, %v1208
    %v1210 = vpop.f32.mrf.mxu0
    %v1211 = vadd.f32 %v1105, %v1210
    %1212 = vmatmul.bf16.gmra.mxu0 %v1081
    %v1213 = vpop.f32.mrf.mxu0
    %v1214 = vadd.f32 %v1105, %v1213
    %v1215 = vpop.f32.mrf.mxu0
    %v1216 = vadd.f32 %v1105, %v1215
    %1217 = vmatmul.bf16.gmra.mxu0 %v1082
    %v1218 = vpop.f32.mrf.mxu0
    %v1219 = vadd.f32 %v1105, %v1218
    %v1220 = vpop.f32.mrf.mxu0
    %v1221 = vadd.f32 %v1105, %v1220
    %1222 = vmatmul.bf16.gmra.mxu0 %v1083
    %v1223 = vpop.f32.mrf.mxu0
    %v1224 = vadd.f32 %v1105, %v1223
    %v1225 = vpop.f32.mrf.mxu0
    %v1226 = vadd.f32 %v1105, %v1225
    %1227 = vmatmul.bf16.gmra.mxu0 %v1084
    %v1228 = vpop.f32.mrf.mxu0
    %v1229 = vadd.f32 %v1105, %v1228
    %v1230 = vpop.f32.mrf.mxu0
    %v1231 = vadd.f32 %v1105, %v1230
    %1232 = vmatmul.bf16.gmra.mxu0 %v1085
    %v1233 = vpop.f32.mrf.mxu0
    %v1234 = vadd.f32 %v1105, %v1233
    %v1235 = vpop.f32.mrf.mxu0
    %v1236 = vadd.f32 %v1105, %v1235
    %1237 = vmatmul.bf16.gmra.mxu0 %v1086
    %v1238 = vpop.f32.mrf.mxu0
    %v1239 = vadd.f32 %v1105, %v1238
    %v1240 = vpop.f32.mrf.mxu0
    %v1241 = vadd.f32 %v1105, %v1240
    %1242 = vdwg.mxu0
    %v1243 = vmul.f32 %v1164, 0.5
    %v1244 = vmul.f32 %v1166, 0.5
    %v1245 = vmul.f32 %v1169, 0.5
    %v1246 = vmul.f32 %v1171, 0.5
    %v1247 = vmul.f32 %v1174, 0.5
    %v1248 = vmul.f32 %v1176, 0.5
    %v1249 = vmul.f32 %v1179, 0.5
    %v1250 = vmul.f32 %v1181, 0.5
    %v1251 = vmul.f32 %v1184, 0.5
    %v1252 = vmul.f32 %v1186, 0.5
    %v1253 = vmul.f32 %v1189, 0.5
    %v1254 = vmul.f32 %v1191, 0.5
    %v1255 = vmul.f32 %v1194, 0.5
    %v1256 = vmul.f32 %v1196, 0.5
    %v1257 = vmul.f32 %v1199, 0.5
    %v1258 = vmul.f32 %v1201, 0.5
    %v1259 = vmul.f32 %v1204, 0.5
    %v1260 = vmul.f32 %v1206, 0.5
    %v1261 = vmul.f32 %v1209, 0.5
    %v1262 = vmul.f32 %v1211, 0.5
    %v1263 = vmul.f32 %v1214, 0.5
    %v1264 = vmul.f32 %v1216, 0.5
    %v1265 = vmul.f32 %v1219, 0.5
    %v1266 = vmul.f32 %v1221, 0.5
    %v1267 = vmul.f32 %v1224, 0.5
    %v1268 = vmul.f32 %v1226, 0.5
    %v1269 = vmul.f32 %v1229, 0.5
    %v1270 = vmul.f32 %v1231, 0.5
    %v1271 = vmul.f32 %v1234, 0.5
    %v1272 = vmul.f32 %v1236, 0.5
    %v1273 = vmul.f32 %v1239, 0.5
    %v1274 = vmul.f32 %v1241, 0.5
    %v1275 = vtanh.pop %v1243
    %v1276 = vtanh.pop %v1244
    %v1277 = vtanh.pop %v1245
    %v1278 = vtanh.pop %v1246
    %v1279 = vtanh.pop %v1247
    %v1280 = vtanh.pop %v1248
    %v1281 = vtanh.pop %v1249
    %v1282 = vtanh.pop %v1250
    %v1283 = vtanh.pop %v1251
    %v1284 = vtanh.pop %v1252
    %v1285 = vtanh.pop %v1253
    %v1286 = vtanh.pop %v1254
    %v1287 = vtanh.pop %v1255
    %v1288 = vtanh.pop %v1256
    %v1289 = vtanh.pop %v1257
    %v1290 = vtanh.pop %v1258
    %v1291 = vtanh.pop %v1259
    %v1292 = vtanh.pop %v1260
    %v1293 = vtanh.pop %v1261
    %v1294 = vtanh.pop %v1262
    %v1295 = vtanh.pop %v1263
    %v1296 = vtanh.pop %v1264
    %v1297 = vtanh.pop %v1265
    %v1298 = vtanh.pop %v1266
    %v1299 = vtanh.pop %v1267
    %v1300 = vtanh.pop %v1268
    %v1301 = vtanh.pop %v1269
    %v1302 = vtanh.pop %v1270
    %v1303 = vtanh.pop %v1271
    %v1304 = vtanh.pop %v1272
    %v1305 = vtanh.pop %v1273
    %v1306 = vtanh.pop %v1274
    %v1307 = vmul.f32 %v1275, 0.5
    %v1308 = vmul.f32 %v1276, 0.5
    %v1309 = vmul.f32 %v1277, 0.5
    %v1310 = vmul.f32 %v1278, 0.5
    %v1311 = vmul.f32 %v1279, 0.5
    %v1312 = vmul.f32 %v1280, 0.5
    %v1313 = vmul.f32 %v1281, 0.5
    %v1314 = vmul.f32 %v1282, 0.5
    %v1315 = vmul.f32 %v1283, 0.5
    %v1316 = vmul.f32 %v1284, 0.5
    %v1317 = vmul.f32 %v1285, 0.5
    %v1318 = vmul.f32 %v1286, 0.5
    %v1319 = vmul.f32 %v1287, 0.5
    %v1320 = vmul.f32 %v1288, 0.5
    %v1321 = vmul.f32 %v1289, 0.5
    %v1322 = vmul.f32 %v1290, 0.5
    %v1323 = vmul.f32 %v1291, 0.5
    %v1324 = vmul.f32 %v1292, 0.5
    %v1325 = vmul.f32 %v1293, 0.5
    %v1326 = vmul.f32 %v1294, 0.5
    %v1327 = vmul.f32 %v1295, 0.5
    %v1328 = vmul.f32 %v1296, 0.5
    %v1329 = vmul.f32 %v1297, 0.5
    %v1330 = vmul.f32 %v1298, 0.5
    %v1331 = vmul.f32 %v1299, 0.5
    %v1332 = vmul.f32 %v1300, 0.5
    %v1333 = vmul.f32 %v1301, 0.5
    %v1334 = vmul.f32 %v1302, 0.5
    %v1335 = vmul.f32 %v1303, 0.5
    %v1336 = vmul.f32 %v1304, 0.5
    %v1337 = vmul.f32 %v1305, 0.5
    %v1338 = vmul.f32 %v1306, 0.5
    %v1339 = vadd.f32 %v1307, 0.5
    %v1340 = vadd.f32 %v1308, 0.5
    %v1341 = vadd.f32 %v1309, 0.5
    %v1342 = vadd.f32 %v1310, 0.5
    %v1343 = vadd.f32 %v1311, 0.5
    %v1344 = vadd.f32 %v1312, 0.5
    %v1345 = vadd.f32 %v1313, 0.5
    %v1346 = vadd.f32 %v1314, 0.5
    %v1347 = vadd.f32 %v1315, 0.5
    %v1348 = vadd.f32 %v1316, 0.5
    %v1349 = vadd.f32 %v1317, 0.5
    %v1350 = vadd.f32 %v1318, 0.5
    %v1351 = vadd.f32 %v1319, 0.5
    %v1352 = vadd.f32 %v1320, 0.5
    %v1353 = vadd.f32 %v1321, 0.5
    %v1354 = vadd.f32 %v1322, 0.5
    %v1355 = vadd.f32 %v1323, 0.5
    %v1356 = vadd.f32 %v1324, 0.5
    %v1357 = vadd.f32 %v1325, 0.5
    %v1358 = vadd.f32 %v1326, 0.5
    %v1359 = vadd.f32 %v1327, 0.5
    %v1360 = vadd.f32 %v1328, 0.5
    %v1361 = vadd.f32 %v1329, 0.5
    %v1362 = vadd.f32 %v1330, 0.5
    %v1363 = vadd.f32 %v1331, 0.5
    %v1364 = vadd.f32 %v1332, 0.5
    %v1365 = vadd.f32 %v1333, 0.5
    %v1366 = vadd.f32 %v1334, 0.5
    %v1367 = vadd.f32 %v1335, 0.5
    %v1368 = vadd.f32 %v1336, 0.5
    %v1369 = vadd.f32 %v1337, 0.5
    %v1370 = vadd.f32 %v1338, 0.5
    %v1371 = vpack.c.bf16 %v1340, %v1339
    %v1372 = vpack.c.bf16 %v1342, %v1341
    %v1373 = vpack.c.bf16 %v1344, %v1343
    %v1374 = vpack.c.bf16 %v1346, %v1345
    %v1375 = vpack.c.bf16 %v1348, %v1347
    %v1376 = vpack.c.bf16 %v1350, %v1349
    %v1377 = vpack.c.bf16 %v1352, %v1351
    %v1378 = vpack.c.bf16 %v1354, %v1353
    %v1379 = vpack.c.bf16 %v1356, %v1355
    %v1380 = vpack.c.bf16 %v1358, %v1357
    %v1381 = vpack.c.bf16 %v1360, %v1359
    %v1382 = vpack.c.bf16 %v1362, %v1361
    %v1383 = vpack.c.bf16 %v1364, %v1363
    %v1384 = vpack.c.bf16 %v1366, %v1365
    %v1385 = vpack.c.bf16 %v1368, %v1367
    %v1386 = vpack.c.bf16 %v1370, %v1369
    %s1387 = scalar_lea.vmem [#allocation5], 256
    %v1388 = vld [vmem:[%s1387] sm:$0xf]
    %v1389 = vld [vmem:[%s1387 + $0x4] sm:$0xf]
    %v1390 = vld [vmem:[%s1387 + $0x8] sm:$0xf]
    %v1391 = vld [vmem:[%s1387 + $0xc] sm:$0xf]
    %v1392 = vld [vmem:[%s1387 + $0x10] sm:$0xf]
    %v1393 = vld [vmem:[%s1387 + $0x14] sm:$0xf]
    %v1394 = vld [vmem:[%s1387 + $0x18] sm:$0xf]
    %v1395 = vld [vmem:[%s1387 + $0x1c] sm:$0xf]
    %v1396 = vld [vmem:[%s1387 + $0x20] sm:$0xf]
    %v1397 = vld [vmem:[%s1387 + $0x24] sm:$0xf]
    %v1398 = vld [vmem:[%s1387 + $0x28] sm:$0xf]
    %v1399 = vld [vmem:[%s1387 + $0x2c] sm:$0xf]
    %v1400 = vld [vmem:[%s1387 + $0x30] sm:$0xf]
    %v1401 = vld [vmem:[%s1387 + $0x34] sm:$0xf]
    %v1402 = vld [vmem:[%s1387 + $0x38] sm:$0xf]
    %v1403 = vld [vmem:[%s1387 + $0x3c] sm:$0xf]
    %v1404 = vld [vmem:[#allocation7 + $0x4] sm:$0x1]
    %v1405 = vperm.slane %v1404, 0
    %v1422 = vunpack.c.l.b16 %v1388
    %v1423 = vunpack.c.l.b16 %v1389
    %v1424 = vunpack.c.l.b16 %v1390
    %v1425 = vunpack.c.l.b16 %v1391
    %v1426 = vunpack.c.l.b16 %v1392
    %v1427 = vunpack.c.l.b16 %v1393
    %v1428 = vunpack.c.l.b16 %v1394
    %v1429 = vunpack.c.l.b16 %v1395
    %v1430 = vunpack.c.l.b16 %v1396
    %v1431 = vunpack.c.l.b16 %v1397
    %v1432 = vunpack.c.l.b16 %v1398
    %v1433 = vunpack.c.l.b16 %v1399
    %v1434 = vunpack.c.l.b16 %v1400
    %v1435 = vunpack.c.l.b16 %v1401
    %v1436 = vunpack.c.l.b16 %v1402
    %v1437 = vunpack.c.l.b16 %v1403
    %v1438 = vpack.c.b16 %v1423, %v1422
    %v1439 = vpack.c.b16 %v1425, %v1424
    %v1440 = vpack.c.b16 %v1427, %v1426
    %v1441 = vpack.c.b16 %v1429, %v1428
    %v1442 = vpack.c.b16 %v1431, %v1430
    %v1443 = vpack.c.b16 %v1433, %v1432
    %v1444 = vpack.c.b16 %v1435, %v1434
    %v1445 = vpack.c.b16 %v1437, %v1436
    %1454 = vmatpush.bf16.msra.mxu0 %v1445
    %1455 = vmatpush.bf16.msra.mxu0 %v1444
    %1456 = vmatpush.bf16.msra.mxu0 %v1443
    %1457 = vmatpush.bf16.msra.mxu0 %v1442
    %1458 = vmatpush.bf16.msra.mxu0 %v1441
    %1459 = vmatpush.bf16.msra.mxu0 %v1440
    %1460 = vmatpush.bf16.msra.mxu0 %v1439
    %1461 = vmatpush.bf16.msra.mxu0 %v1438
    %1462 = vmatmul.bf16.gmra.mxu0 %v1371
    %v1463 = vpop.f32.mrf.mxu0
    %v1464 = vadd.f32 %v1405, %v1463
    %v1465 = vpop.f32.mrf.mxu0
    %v1466 = vadd.f32 %v1405, %v1465
    %1467 = vmatmul.bf16.gmra.mxu0 %v1372
    %v1468 = vpop.f32.mrf.mxu0
    %v1469 = vadd.f32 %v1405, %v1468
    %v1470 = vpop.f32.mrf.mxu0
    %v1471 = vadd.f32 %v1405, %v1470
    %1472 = vmatmul.bf16.gmra.mxu0 %v1373
    %v1473 = vpop.f32.mrf.mxu0
    %v1474 = vadd.f32 %v1405, %v1473
    %v1475 = vpop.f32.mrf.mxu0
    %v1476 = vadd.f32 %v1405, %v1475
    %1477 = vmatmul.bf16.gmra.mxu0 %v1374
    %v1478 = vpop.f32.mrf.mxu0
    %v1479 = vadd.f32 %v1405, %v1478
    %v1480 = vpop.f32.mrf.mxu0
    %v1481 = vadd.f32 %v1405, %v1480
    %1482 = vmatmul.bf16.gmra.mxu0 %v1375
    %v1483 = vpop.f32.mrf.mxu0
    %v1484 = vadd.f32 %v1405, %v1483
    %v1485 = vpop.f32.mrf.mxu0
    %v1486 = vadd.f32 %v1405, %v1485
    %1487 = vmatmul.bf16.gmra.mxu0 %v1376
    %v1488 = vpop.f32.mrf.mxu0
    %v1489 = vadd.f32 %v1405, %v1488
    %v1490 = vpop.f32.mrf.mxu0
    %v1491 = vadd.f32 %v1405, %v1490
    %1492 = vmatmul.bf16.gmra.mxu0 %v1377
    %v1493 = vpop.f32.mrf.mxu0
    %v1494 = vadd.f32 %v1405, %v1493
    %v1495 = vpop.f32.mrf.mxu0
    %v1496 = vadd.f32 %v1405, %v1495
    %1497 = vmatmul.bf16.gmra.mxu0 %v1378
    %v1498 = vpop.f32.mrf.mxu0
    %v1499 = vadd.f32 %v1405, %v1498
    %v1500 = vpop.f32.mrf.mxu0
    %v1501 = vadd.f32 %v1405, %v1500
    %1502 = vmatmul.bf16.gmra.mxu0 %v1379
    %v1503 = vpop.f32.mrf.mxu0
    %v1504 = vadd.f32 %v1405, %v1503
    %v1505 = vpop.f32.mrf.mxu0
    %v1506 = vadd.f32 %v1405, %v1505
    %1507 = vmatmul.bf16.gmra.mxu0 %v1380
    %v1508 = vpop.f32.mrf.mxu0
    %v1509 = vadd.f32 %v1405, %v1508
    %v1510 = vpop.f32.mrf.mxu0
    %v1511 = vadd.f32 %v1405, %v1510
    %1512 = vmatmul.bf16.gmra.mxu0 %v1381
    %v1513 = vpop.f32.mrf.mxu0
    %v1514 = vadd.f32 %v1405, %v1513
    %v1515 = vpop.f32.mrf.mxu0
    %v1516 = vadd.f32 %v1405, %v1515
    %1517 = vmatmul.bf16.gmra.mxu0 %v1382
    %v1518 = vpop.f32.mrf.mxu0
    %v1519 = vadd.f32 %v1405, %v1518
    %v1520 = vpop.f32.mrf.mxu0
    %v1521 = vadd.f32 %v1405, %v1520
    %1522 = vmatmul.bf16.gmra.mxu0 %v1383
    %v1523 = vpop.f32.mrf.mxu0
    %v1524 = vadd.f32 %v1405, %v1523
    %v1525 = vpop.f32.mrf.mxu0
    %v1526 = vadd.f32 %v1405, %v1525
    %1527 = vmatmul.bf16.gmra.mxu0 %v1384
    %v1528 = vpop.f32.mrf.mxu0
    %v1529 = vadd.f32 %v1405, %v1528
    %v1530 = vpop.f32.mrf.mxu0
    %v1531 = vadd.f32 %v1405, %v1530
    %1532 = vmatmul.bf16.gmra.mxu0 %v1385
    %v1533 = vpop.f32.mrf.mxu0
    %v1534 = vadd.f32 %v1405, %v1533
    %v1535 = vpop.f32.mrf.mxu0
    %v1536 = vadd.f32 %v1405, %v1535
    %1537 = vmatmul.bf16.gmra.mxu0 %v1386
    %v1538 = vpop.f32.mrf.mxu0
    %v1539 = vadd.f32 %v1405, %v1538
    %v1540 = vpop.f32.mrf.mxu0
    %v1541 = vadd.f32 %v1405, %v1540
    %1542 = vdwg.mxu0
    %v1543 = vmul.f32 %v1464, 0.5
    %v1544 = vmul.f32 %v1466, 0.5
    %v1545 = vmul.f32 %v1469, 0.5
    %v1546 = vmul.f32 %v1471, 0.5
    %v1547 = vmul.f32 %v1474, 0.5
    %v1548 = vmul.f32 %v1476, 0.5
    %v1549 = vmul.f32 %v1479, 0.5
    %v1550 = vmul.f32 %v1481, 0.5
    %v1551 = vmul.f32 %v1484, 0.5
    %v1552 = vmul.f32 %v1486, 0.5
    %v1553 = vmul.f32 %v1489, 0.5
    %v1554 = vmul.f32 %v1491, 0.5
    %v1555 = vmul.f32 %v1494, 0.5
    %v1556 = vmul.f32 %v1496, 0.5
    %v1557 = vmul.f32 %v1499, 0.5
    %v1558 = vmul.f32 %v1501, 0.5
    %v1559 = vmul.f32 %v1504, 0.5
    %v1560 = vmul.f32 %v1506, 0.5
    %v1561 = vmul.f32 %v1509, 0.5
    %v1562 = vmul.f32 %v1511, 0.5
    %v1563 = vmul.f32 %v1514, 0.5
    %v1564 = vmul.f32 %v1516, 0.5
    %v1565 = vmul.f32 %v1519, 0.5
    %v1566 = vmul.f32 %v1521, 0.5
    %v1567 = vmul.f32 %v1524, 0.5
    %v1568 = vmul.f32 %v1526, 0.5
    %v1569 = vmul.f32 %v1529, 0.5
    %v1570 = vmul.f32 %v1531, 0.5
    %v1571 = vmul.f32 %v1534, 0.5
    %v1572 = vmul.f32 %v1536, 0.5
    %v1573 = vmul.f32 %v1539, 0.5
    %v1574 = vmul.f32 %v1541, 0.5
    %v1575 = vtanh.pop %v1543
    %v1576 = vtanh.pop %v1544
    %v1577 = vtanh.pop %v1545
    %v1578 = vtanh.pop %v1546
    %v1579 = vtanh.pop %v1547
    %v1580 = vtanh.pop %v1548
    %v1581 = vtanh.pop %v1549
    %v1582 = vtanh.pop %v1550
    %v1583 = vtanh.pop %v1551
    %v1584 = vtanh.pop %v1552
    %v1585 = vtanh.pop %v1553
    %v1586 = vtanh.pop %v1554
    %v1587 = vtanh.pop %v1555
    %v1588 = vtanh.pop %v1556
    %v1589 = vtanh.pop %v1557
    %v1590 = vtanh.pop %v1558
    %v1591 = vtanh.pop %v1559
    %v1592 = vtanh.pop %v1560
    %v1593 = vtanh.pop %v1561
    %v1594 = vtanh.pop %v1562
    %v1595 = vtanh.pop %v1563
    %v1596 = vtanh.pop %v1564
    %v1597 = vtanh.pop %v1565
    %v1598 = vtanh.pop %v1566
    %v1599 = vtanh.pop %v1567
    %v1600 = vtanh.pop %v1568
    %v1601 = vtanh.pop %v1569
    %v1602 = vtanh.pop %v1570
    %v1603 = vtanh.pop %v1571
    %v1604 = vtanh.pop %v1572
    %v1605 = vtanh.pop %v1573
    %v1606 = vtanh.pop %v1574
    %v1607 = vmul.f32 %v1575, 0.5
    %v1608 = vmul.f32 %v1576, 0.5
    %v1609 = vmul.f32 %v1577, 0.5
    %v1610 = vmul.f32 %v1578, 0.5
    %v1611 = vmul.f32 %v1579, 0.5
    %v1612 = vmul.f32 %v1580, 0.5
    %v1613 = vmul.f32 %v1581, 0.5
    %v1614 = vmul.f32 %v1582, 0.5
    %v1615 = vmul.f32 %v1583, 0.5
    %v1616 = vmul.f32 %v1584, 0.5
    %v1617 = vmul.f32 %v1585, 0.5
    %v1618 = vmul.f32 %v1586, 0.5
    %v1619 = vmul.f32 %v1587, 0.5
    %v1620 = vmul.f32 %v1588, 0.5
    %v1621 = vmul.f32 %v1589, 0.5
    %v1622 = vmul.f32 %v1590, 0.5
    %v1623 = vmul.f32 %v1591, 0.5
    %v1624 = vmul.f32 %v1592, 0.5
    %v1625 = vmul.f32 %v1593, 0.5
    %v1626 = vmul.f32 %v1594, 0.5
    %v1627 = vmul.f32 %v1595, 0.5
    %v1628 = vmul.f32 %v1596, 0.5
    %v1629 = vmul.f32 %v1597, 0.5
    %v1630 = vmul.f32 %v1598, 0.5
    %v1631 = vmul.f32 %v1599, 0.5
    %v1632 = vmul.f32 %v1600, 0.5
    %v1633 = vmul.f32 %v1601, 0.5
    %v1634 = vmul.f32 %v1602, 0.5
    %v1635 = vmul.f32 %v1603, 0.5
    %v1636 = vmul.f32 %v1604, 0.5
    %v1637 = vmul.f32 %v1605, 0.5
    %v1638 = vmul.f32 %v1606, 0.5
    %v1639 = vadd.f32 %v1607, 0.5
    %v1640 = vadd.f32 %v1608, 0.5
    %v1641 = vadd.f32 %v1609, 0.5
    %v1642 = vadd.f32 %v1610, 0.5
    %v1643 = vadd.f32 %v1611, 0.5
    %v1644 = vadd.f32 %v1612, 0.5
    %v1645 = vadd.f32 %v1613, 0.5
    %v1646 = vadd.f32 %v1614, 0.5
    %v1647 = vadd.f32 %v1615, 0.5
    %v1648 = vadd.f32 %v1616, 0.5
    %v1649 = vadd.f32 %v1617, 0.5
    %v1650 = vadd.f32 %v1618, 0.5
    %v1651 = vadd.f32 %v1619, 0.5
    %v1652 = vadd.f32 %v1620, 0.5
    %v1653 = vadd.f32 %v1621, 0.5
    %v1654 = vadd.f32 %v1622, 0.5
    %v1655 = vadd.f32 %v1623, 0.5
    %v1656 = vadd.f32 %v1624, 0.5
    %v1657 = vadd.f32 %v1625, 0.5
    %v1658 = vadd.f32 %v1626, 0.5
    %v1659 = vadd.f32 %v1627, 0.5
    %v1660 = vadd.f32 %v1628, 0.5
    %v1661 = vadd.f32 %v1629, 0.5
    %v1662 = vadd.f32 %v1630, 0.5
    %v1663 = vadd.f32 %v1631, 0.5
    %v1664 = vadd.f32 %v1632, 0.5
    %v1665 = vadd.f32 %v1633, 0.5
    %v1666 = vadd.f32 %v1634, 0.5
    %v1667 = vadd.f32 %v1635, 0.5
    %v1668 = vadd.f32 %v1636, 0.5
    %v1669 = vadd.f32 %v1637, 0.5
    %v1670 = vadd.f32 %v1638, 0.5
    %v1671 = vpack.c.bf16 %v1640, %v1639
    %v1672 = vpack.c.bf16 %v1642, %v1641
    %v1673 = vpack.c.bf16 %v1644, %v1643
    %v1674 = vpack.c.bf16 %v1646, %v1645
    %v1675 = vpack.c.bf16 %v1648, %v1647
    %v1676 = vpack.c.bf16 %v1650, %v1649
    %v1677 = vpack.c.bf16 %v1652, %v1651
    %v1678 = vpack.c.bf16 %v1654, %v1653
    %v1679 = vpack.c.bf16 %v1656, %v1655
    %v1680 = vpack.c.bf16 %v1658, %v1657
    %v1681 = vpack.c.bf16 %v1660, %v1659
    %v1682 = vpack.c.bf16 %v1662, %v1661
    %v1683 = vpack.c.bf16 %v1664, %v1663
    %v1684 = vpack.c.bf16 %v1666, %v1665
    %v1685 = vpack.c.bf16 %v1668, %v1667
    %v1686 = vpack.c.bf16 %v1670, %v1669
    %s1687 = scalar_lea.vmem [#allocation5], 320
    %v1688 = vld [vmem:[%s1687] sm:$0xf]
    %v1689 = vld [vmem:[%s1687 + $0x4] sm:$0xf]
    %v1690 = vld [vmem:[%s1687 + $0x8] sm:$0xf]
    %v1691 = vld [vmem:[%s1687 + $0xc] sm:$0xf]
    %v1692 = vld [vmem:[%s1687 + $0x10] sm:$0xf]
    %v1693 = vld [vmem:[%s1687 + $0x14] sm:$0xf]
    %v1694 = vld [vmem:[%s1687 + $0x18] sm:$0xf]
    %v1695 = vld [vmem:[%s1687 + $0x1c] sm:$0xf]
    %v1696 = vld [vmem:[%s1687 + $0x20] sm:$0xf]
    %v1697 = vld [vmem:[%s1687 + $0x24] sm:$0xf]
    %v1698 = vld [vmem:[%s1687 + $0x28] sm:$0xf]
    %v1699 = vld [vmem:[%s1687 + $0x2c] sm:$0xf]
    %v1700 = vld [vmem:[%s1687 + $0x30] sm:$0xf]
    %v1701 = vld [vmem:[%s1687 + $0x34] sm:$0xf]
    %v1702 = vld [vmem:[%s1687 + $0x38] sm:$0xf]
    %v1703 = vld [vmem:[%s1687 + $0x3c] sm:$0xf]
    %v1704 = vld [vmem:[#allocation7 + $0x5] sm:$0x1]
    %v1705 = vperm.slane %v1704, 0
    %v1722 = vunpack.c.l.b16 %v1688
    %v1723 = vunpack.c.l.b16 %v1689
    %v1724 = vunpack.c.l.b16 %v1690
    %v1725 = vunpack.c.l.b16 %v1691
    %v1726 = vunpack.c.l.b16 %v1692
    %v1727 = vunpack.c.l.b16 %v1693
    %v1728 = vunpack.c.l.b16 %v1694
    %v1729 = vunpack.c.l.b16 %v1695
    %v1730 = vunpack.c.l.b16 %v1696
    %v1731 = vunpack.c.l.b16 %v1697
    %v1732 = vunpack.c.l.b16 %v1698
    %v1733 = vunpack.c.l.b16 %v1699
    %v1734 = vunpack.c.l.b16 %v1700
    %v1735 = vunpack.c.l.b16 %v1701
    %v1736 = vunpack.c.l.b16 %v1702
    %v1737 = vunpack.c.l.b16 %v1703
    %v1738 = vpack.c.b16 %v1723, %v1722
    %v1739 = vpack.c.b16 %v1725, %v1724
    %v1740 = vpack.c.b16 %v1727, %v1726
    %v1741 = vpack.c.b16 %v1729, %v1728
    %v1742 = vpack.c.b16 %v1731, %v1730
    %v1743 = vpack.c.b16 %v1733, %v1732
    %v1744 = vpack.c.b16 %v1735, %v1734
    %v1745 = vpack.c.b16 %v1737, %v1736
    %1754 = vmatpush.bf16.msra.mxu0 %v1745
    %1755 = vmatpush.bf16.msra.mxu0 %v1744
    %1756 = vmatpush.bf16.msra.mxu0 %v1743
    %1757 = vmatpush.bf16.msra.mxu0 %v1742
    %1758 = vmatpush.bf16.msra.mxu0 %v1741
    %1759 = vmatpush.bf16.msra.mxu0 %v1740
    %1760 = vmatpush.bf16.msra.mxu0 %v1739
    %1761 = vmatpush.bf16.msra.mxu0 %v1738
    %1762 = vmatmul.bf16.gmra.mxu0 %v1671
    %v1763 = vpop.f32.mrf.mxu0
    %v1764 = vadd.f32 %v1705, %v1763
    %v1765 = vpop.f32.mrf.mxu0
    %v1766 = vadd.f32 %v1705, %v1765
    %1767 = vmatmul.bf16.gmra.mxu0 %v1672
    %v1768 = vpop.f32.mrf.mxu0
    %v1769 = vadd.f32 %v1705, %v1768
    %v1770 = vpop.f32.mrf.mxu0
    %v1771 = vadd.f32 %v1705, %v1770
    %1772 = vmatmul.bf16.gmra.mxu0 %v1673
    %v1773 = vpop.f32.mrf.mxu0
    %v1774 = vadd.f32 %v1705, %v1773
    %v1775 = vpop.f32.mrf.mxu0
    %v1776 = vadd.f32 %v1705, %v1775
    %1777 = vmatmul.bf16.gmra.mxu0 %v1674
    %v1778 = vpop.f32.mrf.mxu0
    %v1779 = vadd.f32 %v1705, %v1778
    %v1780 = vpop.f32.mrf.mxu0
    %v1781 = vadd.f32 %v1705, %v1780
    %1782 = vmatmul.bf16.gmra.mxu0 %v1675
    %v1783 = vpop.f32.mrf.mxu0
    %v1784 = vadd.f32 %v1705, %v1783
    %v1785 = vpop.f32.mrf.mxu0
    %v1786 = vadd.f32 %v1705, %v1785
    %1787 = vmatmul.bf16.gmra.mxu0 %v1676
    %v1788 = vpop.f32.mrf.mxu0
    %v1789 = vadd.f32 %v1705, %v1788
    %v1790 = vpop.f32.mrf.mxu0
    %v1791 = vadd.f32 %v1705, %v1790
    %1792 = vmatmul.bf16.gmra.mxu0 %v1677
    %v1793 = vpop.f32.mrf.mxu0
    %v1794 = vadd.f32 %v1705, %v1793
    %v1795 = vpop.f32.mrf.mxu0
    %v1796 = vadd.f32 %v1705, %v1795
    %1797 = vmatmul.bf16.gmra.mxu0 %v1678
    %v1798 = vpop.f32.mrf.mxu0
    %v1799 = vadd.f32 %v1705, %v1798
    %v1800 = vpop.f32.mrf.mxu0
    %v1801 = vadd.f32 %v1705, %v1800
    %1802 = vmatmul.bf16.gmra.mxu0 %v1679
    %v1803 = vpop.f32.mrf.mxu0
    %v1804 = vadd.f32 %v1705, %v1803
    %v1805 = vpop.f32.mrf.mxu0
    %v1806 = vadd.f32 %v1705, %v1805
    %1807 = vmatmul.bf16.gmra.mxu0 %v1680
    %v1808 = vpop.f32.mrf.mxu0
    %v1809 = vadd.f32 %v1705, %v1808
    %v1810 = vpop.f32.mrf.mxu0
    %v1811 = vadd.f32 %v1705, %v1810
    %1812 = vmatmul.bf16.gmra.mxu0 %v1681
    %v1813 = vpop.f32.mrf.mxu0
    %v1814 = vadd.f32 %v1705, %v1813
    %v1815 = vpop.f32.mrf.mxu0
    %v1816 = vadd.f32 %v1705, %v1815
    %1817 = vmatmul.bf16.gmra.mxu0 %v1682
    %v1818 = vpop.f32.mrf.mxu0
    %v1819 = vadd.f32 %v1705, %v1818
    %v1820 = vpop.f32.mrf.mxu0
    %v1821 = vadd.f32 %v1705, %v1820
    %1822 = vmatmul.bf16.gmra.mxu0 %v1683
    %v1823 = vpop.f32.mrf.mxu0
    %v1824 = vadd.f32 %v1705, %v1823
    %v1825 = vpop.f32.mrf.mxu0
    %v1826 = vadd.f32 %v1705, %v1825
    %1827 = vmatmul.bf16.gmra.mxu0 %v1684
    %v1828 = vpop.f32.mrf.mxu0
    %v1829 = vadd.f32 %v1705, %v1828
    %v1830 = vpop.f32.mrf.mxu0
    %v1831 = vadd.f32 %v1705, %v1830
    %1832 = vmatmul.bf16.gmra.mxu0 %v1685
    %v1833 = vpop.f32.mrf.mxu0
    %v1834 = vadd.f32 %v1705, %v1833
    %v1835 = vpop.f32.mrf.mxu0
    %v1836 = vadd.f32 %v1705, %v1835
    %1837 = vmatmul.bf16.gmra.mxu0 %v1686
    %v1838 = vpop.f32.mrf.mxu0
    %v1839 = vadd.f32 %v1705, %v1838
    %v1840 = vpop.f32.mrf.mxu0
    %v1841 = vadd.f32 %v1705, %v1840
    %1842 = vdwg.mxu0
    %1843 = vst [vmem:[#allocation8] sm:$0xff] %v1764
    %1844 = vst [vmem:[#allocation8 + $0x8] sm:$0xff] %v1766
    %1845 = vst [vmem:[#allocation8 + $0x10] sm:$0xff] %v1769
    %1846 = vst [vmem:[#allocation8 + $0x18] sm:$0xff] %v1771
    %1847 = vst [vmem:[#allocation8 + $0x20] sm:$0xff] %v1774
    %1848 = vst [vmem:[#allocation8 + $0x28] sm:$0xff] %v1776
    %1849 = vst [vmem:[#allocation8 + $0x30] sm:$0xff] %v1779
    %1850 = vst [vmem:[#allocation8 + $0x38] sm:$0xff] %v1781
    %1851 = vst [vmem:[#allocation8 + $0x40] sm:$0xff] %v1784
    %1852 = vst [vmem:[#allocation8 + $0x48] sm:$0xff] %v1786
    %1853 = vst [vmem:[#allocation8 + $0x50] sm:$0xff] %v1789
    %1854 = vst [vmem:[#allocation8 + $0x58] sm:$0xff] %v1791
    %1855 = vst [vmem:[#allocation8 + $0x60] sm:$0xff] %v1794
    %1856 = vst [vmem:[#allocation8 + $0x68] sm:$0xff] %v1796
    %1857 = vst [vmem:[#allocation8 + $0x70] sm:$0xff] %v1799
    %1858 = vst [vmem:[#allocation8 + $0x78] sm:$0xff] %v1801
    %1859 = vst [vmem:[#allocation8 + $0x80] sm:$0xff] %v1804
    %1860 = vst [vmem:[#allocation8 + $0x88] sm:$0xff] %v1806
    %1861 = vst [vmem:[#allocation8 + $0x90] sm:$0xff] %v1809
    %1862 = vst [vmem:[#allocation8 + $0x98] sm:$0xff] %v1811
    %1863 = vst [vmem:[#allocation8 + $0xa0] sm:$0xff] %v1814
    %1864 = vst [vmem:[#allocation8 + $0xa8] sm:$0xff] %v1816
    %1865 = vst [vmem:[#allocation8 + $0xb0] sm:$0xff] %v1819
    %1866 = vst [vmem:[#allocation8 + $0xb8] sm:$0xff] %v1821
    %1867 = vst [vmem:[#allocation8 + $0xc0] sm:$0xff] %v1824
    %1868 = vst [vmem:[#allocation8 + $0xc8] sm:$0xff] %v1826
    %1869 = vst [vmem:[#allocation8 + $0xd0] sm:$0xff] %v1829
    %1870 = vst [vmem:[#allocation8 + $0xd8] sm:$0xff] %v1831
    %1871 = vst [vmem:[#allocation8 + $0xe0] sm:$0xff] %v1834
    %1872 = vst [vmem:[#allocation8 + $0xe8] sm:$0xff] %v1836
    %1873 = vst [vmem:[#allocation8 + $0xf0] sm:$0xff] %v1839
    %1874 = vst [vmem:[#allocation8 + $0xf8] sm:$0xff] %v1841
    // Predicated region
    $region26: #{tpu_custom_call.1} parent=1 // pred_check
      _
    $region27: #{tpu_custom_call.1} parent=1 // pred_check_branch
      %1876 = sbr.rel (0) target = $region29
    $region28: #{tpu_custom_call.1} parent=1 // pred_region
      %1878 = vsyncadd [#allocation4], 0
      %s1879 = sshll.u32 [#allocation8], 4
      %s1880 = int_to_ptr.vmem [resolvable:$true] %s1879
      %s1881 = sshll.u32 %s3, 4
      %s1882 = int_to_ptr.hbm [resolvable:$true] %s1881
      %1887 = dma.vmem_to_hbm [thread:$0]  %s1880, 4096, %s1882, [#allocation4], 128, 128, 8
    $region29: #{tpu_custom_call.1} parent=1 // pred_fallthru
      _
    // Predicated region
    $region30: #{tpu_custom_call.1} parent=1 // pred_check
      _
    $region31: #{tpu_custom_call.1} parent=1 // pred_check_branch
      %1889 = sbr.rel (0) target = $region33
    $region32: #{tpu_custom_call.1} parent=1 // pred_region
      %1891 = dma.done [#allocation4], 4096
    $region33: #{tpu_custom_call.1} parent=1 // pred_fallthru
      _
    %1892 = vsyncpa [#allocation3], 1
    %1893 = vsyncpa [#allocation6], 1
    %1894 = vsyncpa [#allocation4], 1

</llo_original>
